<compile_context>
chip_gen: v5e
topology: v5e:2x2
jax: 0.10.0
libtpu: 0.0.40
codegen_flags: <defaults>
</compile_context>

<pallas_src>
import numpy as np
import jax
import jax.numpy as jnp
from jax import lax
from jax.experimental import pallas as pl
from jax.experimental.pallas import tpu as pltpu

# ---------------- model hyper-parameters (small, consistent with the module) --
EMB = 32            # emb_size
INT_EMB = 16        # int_emb_size
BASIS = 8           # basis_emb_size
NUM_RADIAL = 8
NUM_SPHERICAL = 4
SBF_DIM = NUM_RADIAL * NUM_SPHERICAL
NUM_BEFORE = 1      # num_before_skip
NUM_AFTER = 2       # num_after_skip

MAX_TILE_E = 512    # edge-tile rows (pipelined grid over E)
MAX_TILE_T = 512    # triplet-tile rows (grid over T)


def _silu(x):
    return x * jax.nn.sigmoid(x)


def _round_up(x, m):
    return (x + m - 1) // m * m


def _resident(shape):
    """Full-array block with a constant index_map (weight stays in VMEM)."""
    nd = len(shape)
    return pl.BlockSpec(shape, lambda *_, _n=nd: (0,) * _n)


# ---------------------------- kernel 1: edge_transfer -------------------------
def edge_transfer_kernel(rbf_ref, m_ref, w_rbf_ref, w_cat_ref, b_cat_ref,
                         w_down_ref, x_ji_ref, x_kj_ref):
    # folded rbf projection: rbf @ (w_rbf1 @ w_rbf2)
    rbf_p = jnp.dot(rbf_ref[...], w_rbf_ref[...],
                    preferred_element_type=jnp.float32)                 # [tE, EMB]
    # fused dense_ji / dense_kj: one matmul with 2*EMB output lanes
    h = jnp.dot(m_ref[...], w_cat_ref[...],
                preferred_element_type=jnp.float32) + b_cat_ref[...]    # [tE, 2*EMB]
    h = _silu(h)
    x_ji = h[:, :EMB]
    x_kj = h[:, EMB:]
    x_kj = _silu(jnp.dot(x_kj * rbf_p, w_down_ref[...],
                         preferred_element_type=jnp.float32))           # [tE, INT]
    x_ji_ref[...] = x_ji
    x_kj_ref[...] = x_kj


def run_edge_transfer(rbf, m, w_rbf, w_cat, b_cat, w_down, tile_e):
    e_pad = m.shape[0]
    n = e_pad // tile_e
    return pl.pallas_call(
        edge_transfer_kernel,
        grid=(n,),
        in_specs=[
            pl.BlockSpec((tile_e, NUM_RADIAL), lambda i: (i, 0)),
            pl.BlockSpec((tile_e, EMB), lambda i: (i, 0)),
            _resident(w_rbf.shape),
            _resident(w_cat.shape),
            _resident(b_cat.shape),
            _resident(w_down.shape),
        ],
        out_specs=(pl.BlockSpec((tile_e, EMB), lambda i: (i, 0)),
                   pl.BlockSpec((tile_e, INT_EMB), lambda i: (i, 0))),
        out_shape=(jax.ShapeDtypeStruct((e_pad, EMB), jnp.float32),
                   jax.ShapeDtypeStruct((e_pad, INT_EMB), jnp.float32)),
        compiler_params=pltpu.CompilerParams(dimension_semantics=("parallel",)),
    )(rbf, m, w_rbf, w_cat, b_cat, w_down)


# ------------- kernel 2: msg_func + sum aggregation (reverse line graph) ------
# Index-based gather + scatter-sum.  idx_kj / idx_ji are scalar-prefetched into
# SMEM; x_kj ([E, INT]) and the m_update accumulator ([E, INT]) stay resident
# in VMEM across the triplet-tile grid.
def triplet_agg_kernel(idx_kj_ref, idx_ji_ref,        # scalar-prefetch (SMEM)
                       sbf_ref, x_kj_ref, w_sbf_ref,  # inputs
                       out_ref,                       # resident accumulator
                       sbfp_ref):                     # VMEM scratch
    tile = pl.program_id(0)
    tile_t = sbf_ref.shape[0]

    @pl.when(tile == 0)
    def _():
        out_ref[...] = jnp.zeros_like(out_ref)

    # folded sbf projection: sbf @ (w_sbf1 @ w_sbf2)
    sbfp_ref[...] = jnp.dot(sbf_ref[...], w_sbf_ref[...],
                            preferred_element_type=jnp.float32)         # [tT, INT]

    base = tile * tile_t

    def body(t, carry):
        src = idx_kj_ref[base + t]          # source edge of triplet
        dst = idx_ji_ref[base + t]          # destination edge of triplet
        msg = x_kj_ref[pl.ds(src, 1), :] * sbfp_ref[pl.ds(t, 1), :]
        out_ref[pl.ds(dst, 1), :] = out_ref[pl.ds(dst, 1), :] + msg
        return carry

    lax.fori_loop(0, tile_t, body, 0)


def run_triplet_agg(idx_kj, idx_ji, sbf, x_kj, w_sbf, tile_t):
    t_pad = sbf.shape[0]
    e_pad = x_kj.shape[0]
    n = t_pad // tile_t
    grid_spec = pltpu.PrefetchScalarGridSpec(
        num_scalar_prefetch=2,
        grid=(n,),
        in_specs=[
            pl.BlockSpec((tile_t, SBF_DIM), lambda t, *_: (t, 0)),
            pl.BlockSpec((e_pad, INT_EMB), lambda t, *_: (0, 0)),   # resident
            pl.BlockSpec((SBF_DIM, INT_EMB), lambda t, *_: (0, 0)),  # resident
        ],
        out_specs=pl.BlockSpec((e_pad, INT_EMB), lambda t, *_: (0, 0)),
        scratch_shapes=[pltpu.VMEM((tile_t, INT_EMB), jnp.float32)],
    )
    return pl.pallas_call(
        triplet_agg_kernel,
        grid_spec=grid_spec,
        out_shape=jax.ShapeDtypeStruct((e_pad, INT_EMB), jnp.float32),
        compiler_params=pltpu.CompilerParams(dimension_semantics=("arbitrary",)),
    )(idx_kj, idx_ji, sbf, x_kj, w_sbf)


# -------- kernel 3: up-projection, skips, residual stacks, final output -------
def edge_update_kernel(mu_ref, x_ji_ref, m_ref, w_up_ref,
                       wb1_ref, bb1_ref, wb2_ref, bb2_ref,
                       w_fin_ref, b_fin_ref,
                       wa1_ref, ba1_ref, wa2_ref, ba2_ref, out_ref):
    h = _silu(jnp.dot(mu_ref[...], w_up_ref[...],
                      preferred_element_type=jnp.float32))
    h = h + x_ji_ref[...]
    for i in range(NUM_BEFORE):   # ResidualLayer: x + act(W2 act(W1 x + b1) + b2)
        t = _silu(jnp.dot(h, wb1_ref[i], preferred_element_type=jnp.float32) + bb1_ref[i])
        t = _silu(jnp.dot(t, wb2_ref[i], preferred_element_type=jnp.float32) + bb2_ref[i])
        h = h + t
    h = _silu(jnp.dot(h, w_fin_ref[...], preferred_element_type=jnp.float32)
              + b_fin_ref[...])
    m_new = m_ref[...] + h
    for i in range(NUM_AFTER):
        t = _silu(jnp.dot(m_new, wa1_ref[i], preferred_element_type=jnp.float32) + ba1_ref[i])
        t = _silu(jnp.dot(t, wa2_ref[i], preferred_element_type=jnp.float32) + ba2_ref[i])
        m_new = m_new + t
    out_ref[...] = m_new


def run_edge_update(mu, x_ji, m, p, tile_e):
    e_pad = m.shape[0]
    n = e_pad // tile_e
    weights = (p["w_up"], p["wb1"], p["bb1"], p["wb2"], p["bb2"],
               p["w_fin"], p["b_fin"], p["wa1"], p["ba1"], p["wa2"], p["ba2"])
    in_specs = [pl.BlockSpec((tile_e, INT_EMB), lambda i: (i, 0)),
                pl.BlockSpec((tile_e, EMB), lambda i: (i, 0)),
                pl.BlockSpec((tile_e, EMB), lambda i: (i, 0))]
    in_specs += [_resident(w.shape) for w in weights]
    return pl.pallas_call(
        edge_update_kernel,
        grid=(n,),
        in_specs=in_specs,
        out_specs=pl.BlockSpec((tile_e, EMB), lambda i: (i, 0)),
        out_shape=jax.ShapeDtypeStruct((e_pad, EMB), jnp.float32),
        compiler_params=pltpu.CompilerParams(dimension_semantics=("parallel",)),
    )(mu, x_ji, m, *weights)


# ------------------------------- full forward ---------------------------------
def interaction_pp_block(rbf, sbf, m, idx_kj, idx_ji, params):
    """Returns the updated edge feature 'm' (g.edata['m'] after the block)."""
    E = m.shape[0]
    T = sbf.shape[0]
    tile_e = MAX_TILE_E if E >= MAX_TILE_E else _round_up(E, 8)
    tile_t = MAX_TILE_T if T >= MAX_TILE_T else _round_up(T, 8)
    e_pad = _round_up(E, tile_e)
    t_pad = _round_up(T, tile_t)

    # trace-time weight folding (associativity) and ji/kj fusion (glue only)
    w_rbf = params["w_rbf1"] @ params["w_rbf2"]                 # [NUM_RADIAL, EMB]
    w_sbf = params["w_sbf1"] @ params["w_sbf2"]                 # [SBF_DIM, INT_EMB]
    w_cat = jnp.concatenate([params["w_ji"], params["w_kj"]], axis=1)   # [EMB, 2*EMB]
    b_cat = jnp.concatenate([params["b_ji"], params["b_kj"]], axis=1)   # [1, 2*EMB]

    # pad edge/triplet axes to tile multiples (padded sbf rows are zero and
    # padded indices are 0, so they contribute nothing to the aggregation)
    rbf_p = jnp.pad(rbf, ((0, e_pad - E), (0, 0)))
    m_p = jnp.pad(m, ((0, e_pad - E), (0, 0)))
    sbf_p = jnp.pad(sbf, ((0, t_pad - T), (0, 0)))
    idx_kj_p = jnp.pad(idx_kj.astype(jnp.int32), (0, t_pad - T))
    idx_ji_p = jnp.pad(idx_ji.astype(jnp.int32), (0, t_pad - T))

    x_ji, x_kj = run_edge_transfer(rbf_p, m_p, w_rbf, w_cat, b_cat,
                                   params["w_down"], tile_e)
    m_update_int = run_triplet_agg(idx_kj_p, idx_ji_p, sbf_p, x_kj, w_sbf, tile_t)
    out = run_edge_update(m_update_int, x_ji, m_p, params, tile_e)
    return out[:E]


# ---------------------------- parameter construction --------------------------
def glorot(key, fan_in, fan_out):
    # GlorotOrthogonal approximated by scaled normal (synthetic weights).
    return jnp.sqrt(2.0 / (fan_in + fan_out)) * jax.random.normal(
        key, (fan_in, fan_out), dtype=jnp.float32)


def make_params(key):
    ks = jax.random.split(key, 16)
    p = {
        "w_rbf1": glorot(ks[0], NUM_RADIAL, BASIS),
        "w_rbf2": glorot(ks[1], BASIS, EMB),
        "w_sbf1": glorot(ks[2], SBF_DIM, BASIS),
        "w_sbf2": glorot(ks[3], BASIS, INT_EMB),
        "w_ji": glorot(ks[4], EMB, EMB),
        "b_ji": jnp.zeros((1, EMB), jnp.float32),
        "w_kj": glorot(ks[5], EMB, EMB),
        "b_kj": jnp.zeros((1, EMB), jnp.float32),
        "w_down": glorot(ks[6], EMB, INT_EMB),
        "w_up": glorot(ks[7], INT_EMB, EMB),
        "w_fin": glorot(ks[8], EMB, EMB),
        "b_fin": 0.01 * jax.random.normal(ks[9], (1, EMB), dtype=jnp.float32),
    }
    kb = jax.random.split(ks[10], 4 * NUM_BEFORE)
    ka = jax.random.split(ks[11], 4 * NUM_AFTER)
    p["wb1"] = jnp.stack([glorot(kb[4 * i + 0], EMB, EMB) for i in range(NUM_BEFORE)])
    p["wb2"] = jnp.stack([glorot(kb[4 * i + 1], EMB, EMB) for i in range(NUM_BEFORE)])
    p["bb1"] = jnp.stack([0.01 * jax.random.normal(kb[4 * i + 2], (1, EMB)) for i in range(NUM_BEFORE)]).astype(jnp.float32)
    p["bb2"] = jnp.stack([0.01 * jax.random.normal(kb[4 * i + 3], (1, EMB)) for i in range(NUM_BEFORE)]).astype(jnp.float32)
    p["wa1"] = jnp.stack([glorot(ka[4 * i + 0], EMB, EMB) for i in range(NUM_AFTER)])
    p["wa2"] = jnp.stack([glorot(ka[4 * i + 1], EMB, EMB) for i in range(NUM_AFTER)])
    p["ba1"] = jnp.stack([0.01 * jax.random.normal(ka[4 * i + 2], (1, EMB)) for i in range(NUM_AFTER)]).astype(jnp.float32)
    p["ba2"] = jnp.stack([0.01 * jax.random.normal(ka[4 * i + 3], (1, EMB)) for i in range(NUM_AFTER)]).astype(jnp.float32)
    return p


# -------------------------------- pure-JAX reference --------------------------
def reference(rbf, sbf, m, idx_kj, idx_ji, p):
    E = m.shape[0]
    rbf_p = rbf @ p["w_rbf1"] @ p["w_rbf2"]
    x_ji = _silu(m @ p["w_ji"] + p["b_ji"])
    x_kj = _silu(m @ p["w_kj"] + p["b_kj"])
    x_kj = _silu((x_kj * rbf_p) @ p["w_down"])
    sbf_p = sbf @ p["w_sbf1"] @ p["w_sbf2"]
    msg = x_kj[idx_kj] * sbf_p
    mu = jnp.zeros((E, INT_EMB), jnp.float32).at[idx_ji].add(msg)
    h = _silu(mu @ p["w_up"]) + x_ji
    for i in range(NUM_BEFORE):
        t = _silu(h @ p["wb1"][i] + p["bb1"][i])
        t = _silu(t @ p["wb2"][i] + p["bb2"][i])
        h = h + t
    h = _silu(h @ p["w_fin"] + p["b_fin"])
    out = m + h
    for i in range(NUM_AFTER):
        t = _silu(out @ p["wa1"][i] + p["ba1"][i])
        t = _silu(t @ p["wa2"][i] + p["ba2"][i])
        out = out + t
    return out


# ------------------------------------ main -------------------------------------
if __name__ == "__main__":
    key = jax.random.PRNGKey(0)
    k_par, k_rbf, k_sbf, k_m, k_kj, k_ji = jax.random.split(key, 6)

    E = 16   # number of directed edges of g
    T = 32   # number of triplets (edges of the reversed line graph)

    params = make_params(k_par)
    rbf = jax.random.normal(k_rbf, (E, NUM_RADIAL), dtype=jnp.float32)
    sbf = jax.random.normal(k_sbf, (T, SBF_DIM), dtype=jnp.float32)
    m = jax.random.normal(k_m, (E, EMB), dtype=jnp.float32)
    idx_kj = jax.random.randint(k_kj, (T,), 0, E)   # source edge of each triplet
    idx_ji = jax.random.randint(k_ji, (T,), 0, E)   # destination edge of each triplet

    fwd = jax.jit(interaction_pp_block)
    out = jax.block_until_ready(fwd(rbf, sbf, m, idx_kj, idx_ji, params))

    # Reference in full-f32 matmul precision; the tolerance below covers only
    # MXU f32-emulation precision differences between the XLA dot path and the
    # Mosaic matmul path (the index-based gather/scatter itself is exact).
    with jax.default_matmul_precision("float32"):
        ref = jax.block_until_ready(reference(rbf, sbf, m, idx_kj, idx_ji, params))

    max_diff = float(jnp.max(jnp.abs(out - ref)))
    if not np.isfinite(max_diff) or max_diff > 1e-2:
        raise ValueError(f"Pallas output mismatch vs reference: max|diff|={max_diff}")

    print("KERNEL_OK")
</pallas_src>

<mosaic_0001>
module attributes {stable_mosaic.version = 11 : i64} {
  func.func @edge_transfer_kernel(%arg0: i32, %arg1: memref<16x8xf32, #tpu.memory_space<vmem>>, %arg2: memref<16x32xf32, #tpu.memory_space<vmem>>, %arg3: memref<8x32xf32, #tpu.memory_space<vmem>>, %arg4: memref<32x64xf32, #tpu.memory_space<vmem>>, %arg5: memref<1x64xf32, #tpu.memory_space<vmem>>, %arg6: memref<32x16xf32, #tpu.memory_space<vmem>>, %arg7: memref<16x32xf32, #tpu.memory_space<vmem>>, %arg8: memref<16x16xf32, #tpu.memory_space<vmem>>) attributes {dimension_semantics = [#tpu.dimension_semantics<parallel>], iteration_bounds = array<i64: 1>, scalar_prefetch = 0 : i64, scratch_operands = 0 : i64, tpu.core_type = #tpu.core_type<tc>, window_params = [{transform_indices = @transform_0, window_bounds = array<i64: 16, 8>}, {transform_indices = @transform_1, window_bounds = array<i64: 16, 32>}, {pipeline_mode = #tpu.pipeline_mode<synchronous>, transform_indices = @transform_2, window_bounds = array<i64: 8, 32>}, {pipeline_mode = #tpu.pipeline_mode<synchronous>, transform_indices = @transform_3, window_bounds = array<i64: 32, 64>}, {pipeline_mode = #tpu.pipeline_mode<synchronous>, transform_indices = @transform_4, window_bounds = array<i64: 1, 64>}, {pipeline_mode = #tpu.pipeline_mode<synchronous>, transform_indices = @transform_5, window_bounds = array<i64: 32, 16>}, {transform_indices = @transform_6, window_bounds = array<i64: 16, 32>}, {transform_indices = @transform_7, window_bounds = array<i64: 16, 16>}]} {
    %c0 = arith.constant 0 : index
    %c0_0 = arith.constant 0 : index
    %0 = vector.load %arg1[%c0, %c0_0] : memref<16x8xf32, #tpu.memory_space<vmem>>, vector<16x8xf32>
    %c0_1 = arith.constant 0 : index
    %c0_2 = arith.constant 0 : index
    %1 = vector.load %arg3[%c0_1, %c0_2] : memref<8x32xf32, #tpu.memory_space<vmem>>, vector<8x32xf32>
    %cst = arith.constant dense<0.000000e+00> : vector<16x32xf32>
    %2 = tpu.matmul %0, %1, %cst {dimension_numbers = #tpu.dot_dimension_numbers<[1], [0], [0], [1], [0, 0, 1, 1], [], []>} : vector<16x8xf32>, vector<8x32xf32>, vector<16x32xf32> -> vector<16x32xf32>
    %c0_3 = arith.constant 0 : index
    %c0_4 = arith.constant 0 : index
    %3 = vector.load %arg2[%c0_3, %c0_4] : memref<16x32xf32, #tpu.memory_space<vmem>>, vector<16x32xf32>
    %c0_5 = arith.constant 0 : index
    %c0_6 = arith.constant 0 : index
    %4 = vector.load %arg4[%c0_5, %c0_6] : memref<32x64xf32, #tpu.memory_space<vmem>>, vector<32x64xf32>
    %cst_7 = arith.constant dense<0.000000e+00> : vector<16x64xf32>
    %5 = tpu.matmul %3, %4, %cst_7 {dimension_numbers = #tpu.dot_dimension_numbers<[1], [0], [0], [1], [0, 0, 1, 1], [], []>} : vector<16x32xf32>, vector<32x64xf32>, vector<16x64xf32> -> vector<16x64xf32>
    %c0_8 = arith.constant 0 : index
    %c0_9 = arith.constant 0 : index
    %6 = vector.load %arg5[%c0_8, %c0_9] : memref<1x64xf32, #tpu.memory_space<vmem>>, vector<1x64xf32>
    %7 = vector.broadcast %6 : vector<1x64xf32> to vector<16x64xf32>
    %8 = arith.addf %5, %7 : vector<16x64xf32>
    %9 = arith.negf %8 : vector<16x64xf32>
    %10 = math.exp %9 : vector<16x64xf32>
    %cst_10 = arith.constant 1.000000e+00 : f32
    %11 = vector.broadcast %cst_10 : f32 to vector<16x64xf32>
    %12 = arith.addf %11, %10 : vector<16x64xf32>
    %13 = arith.divf %11, %12 : vector<16x64xf32>
    %14 = arith.mulf %8, %13 : vector<16x64xf32>
    %15 = vector.extract_strided_slice %14 {offsets = [0, 0], sizes = [16, 32], strides = [1, 1]} : vector<16x64xf32> to vector<16x32xf32>
    %16 = vector.extract_strided_slice %14 {offsets = [0, 32], sizes = [16, 32], strides = [1, 1]} : vector<16x64xf32> to vector<16x32xf32>
    %17 = arith.mulf %16, %2 : vector<16x32xf32>
    %c0_11 = arith.constant 0 : index
    %c0_12 = arith.constant 0 : index
    %18 = vector.load %arg6[%c0_11, %c0_12] : memref<32x16xf32, #tpu.memory_space<vmem>>, vector<32x16xf32>
    %cst_13 = arith.constant dense<0.000000e+00> : vector<16x16xf32>
    %19 = tpu.matmul %17, %18, %cst_13 {dimension_numbers = #tpu.dot_dimension_numbers<[1], [0], [0], [1], [0, 0, 1, 1], [], []>} : vector<16x32xf32>, vector<32x16xf32>, vector<16x16xf32> -> vector<16x16xf32>
    %20 = arith.negf %19 : vector<16x16xf32>
    %21 = math.exp %20 : vector<16x16xf32>
    %cst_14 = arith.constant 1.000000e+00 : f32
    %22 = vector.broadcast %cst_14 : f32 to vector<16x16xf32>
    %23 = arith.addf %22, %21 : vector<16x16xf32>
    %24 = arith.divf %22, %23 : vector<16x16xf32>
    %25 = arith.mulf %19, %24 : vector<16x16xf32>
    %c0_15 = arith.constant 0 : index
    %c0_16 = arith.constant 0 : index
    %26 = vector.load %arg7[%c0_15, %c0_16] : memref<16x32xf32, #tpu.memory_space<vmem>>, vector<16x32xf32>
    tpu.vector_store %arg7[%c0_15, %c0_16], %15 {strides = array<i32>} : memref<16x32xf32, #tpu.memory_space<vmem>>, vector<16x32xf32>,
    %c0_17 = arith.constant 0 : index
    %c0_18 = arith.constant 0 : index
    %27 = vector.load %arg8[%c0_17, %c0_18] : memref<16x16xf32, #tpu.memory_space<vmem>>, vector<16x16xf32>
    tpu.vector_store %arg8[%c0_17, %c0_18], %25 {strides = array<i32>} : memref<16x16xf32, #tpu.memory_space<vmem>>, vector<16x16xf32>,
    return
  }
  func.func @transform_0(%arg0: i32) -> (i32, i32) {
    %c0_i32 = arith.constant 0 : i32
    %c0_i32_0 = arith.constant 0 : i32
    return %arg0, %c0_i32 : i32, i32
  }
  func.func @transform_1(%arg0: i32) -> (i32, i32) {
    %c0_i32 = arith.constant 0 : i32
    %c0_i32_0 = arith.constant 0 : i32
    return %arg0, %c0_i32 : i32, i32
  }
  func.func @transform_2(%arg0: i32) -> (i32, i32) {
    %c0_i32 = arith.constant 0 : i32
    %c0_i32_0 = arith.constant 0 : i32
    %c0_i32_1 = arith.constant 0 : i32
    return %c0_i32, %c0_i32_0 : i32, i32
  }
  func.func @transform_3(%arg0: i32) -> (i32, i32) {
    %c0_i32 = arith.constant 0 : i32
    %c0_i32_0 = arith.constant 0 : i32
    %c0_i32_1 = arith.constant 0 : i32
    return %c0_i32, %c0_i32_0 : i32, i32
  }
  func.func @transform_4(%arg0: i32) -> (i32, i32) {
    %c0_i32 = arith.constant 0 : i32
    %c0_i32_0 = arith.constant 0 : i32
    %c0_i32_1 = arith.constant 0 : i32
    return %c0_i32, %c0_i32_0 : i32, i32
  }
  func.func @transform_5(%arg0: i32) -> (i32, i32) {
    %c0_i32 = arith.constant 0 : i32
    %c0_i32_0 = arith.constant 0 : i32
    %c0_i32_1 = arith.constant 0 : i32
    return %c0_i32, %c0_i32_0 : i32, i32
  }
  func.func @transform_6(%arg0: i32) -> (i32, i32) {
    %c0_i32 = arith.constant 0 : i32
    %c0_i32_0 = arith.constant 0 : i32
    return %arg0, %c0_i32 : i32, i32
  }
  func.func @transform_7(%arg0: i32) -> (i32, i32) {
    %c0_i32 = arith.constant 0 : i32
    %c0_i32_0 = arith.constant 0 : i32
    return %arg0, %c0_i32 : i32, i32
  }
}

module attributes {stable_mosaic.version = 11 : i64} {
  func.func @triplet_agg_kernel(%arg0: i32, %arg1: memref<32xi32, #tpu.memory_space<smem>>, %arg2: memref<32xi32, #tpu.memory_space<smem>>, %arg3: memref<32x32xf32, #tpu.memory_space<vmem>>, %arg4: memref<16x16xf32, #tpu.memory_space<vmem>>, %arg5: memref<32x16xf32, #tpu.memory_space<vmem>>, %arg6: memref<16x16xf32, #tpu.memory_space<vmem>>, %arg7: memref<32x16xf32, #tpu.memory_space<vmem>>) attributes {dimension_semantics = [#tpu.dimension_semantics<arbitrary>], iteration_bounds = array<i64: 1>, scalar_prefetch = 2 : i64, scratch_operands = 1 : i64, tpu.core_type = #tpu.core_type<tc>, window_params = [{transform_indices = @transform_0, window_bounds = array<i64: 32, 32>}, {pipeline_mode = #tpu.pipeline_mode<synchronous>, transform_indices = @transform_1, window_bounds = array<i64: 16, 16>}, {pipeline_mode = #tpu.pipeline_mode<synchronous>, transform_indices = @transform_2, window_bounds = array<i64: 32, 16>}, {pipeline_mode = #tpu.pipeline_mode<synchronous>, transform_indices = @transform_3, window_bounds = array<i64: 16, 16>}]} {
    %c0_i32 = arith.constant 0 : i32
    %0 = arith.cmpi eq, %arg0, %c0_i32 : i32
    %1 = arith.extui %0 : i1 to i32
    %c0_i32_0 = arith.constant 0 : i32
    %2 = arith.cmpi ne, %1, %c0_i32_0 : i32
    scf.if %2 {
      %cst_9 = arith.constant 0.000000e+00 : f32
      %9 = vector.broadcast %cst_9 : f32 to vector<16x16xf32>
      %c0_10 = arith.constant 0 : index
      %c0_11 = arith.constant 0 : index
      %10 = vector.load %arg6[%c0_10, %c0_11] : memref<16x16xf32, #tpu.memory_space<vmem>>, vector<16x16xf32>
      tpu.vector_store %arg6[%c0_10, %c0_11], %9 {strides = array<i32>} : memref<16x16xf32, #tpu.memory_space<vmem>>, vector<16x16xf32>,
    } else {
    }
    %c0 = arith.constant 0 : index
    %c0_1 = arith.constant 0 : index
    %3 = vector.load %arg3[%c0, %c0_1] : memref<32x32xf32, #tpu.memory_space<vmem>>, vector<32x32xf32>
    %c0_2 = arith.constant 0 : index
    %c0_3 = arith.constant 0 : index
    %4 = vector.load %arg5[%c0_2, %c0_3] : memref<32x16xf32, #tpu.memory_space<vmem>>, vector<32x16xf32>
    %cst = arith.constant dense<0.000000e+00> : vector<32x16xf32>
    %5 = tpu.matmul %3, %4, %cst {dimension_numbers = #tpu.dot_dimension_numbers<[1], [0], [0], [1], [0, 0, 1, 1], [], []>} : vector<32x32xf32>, vector<32x16xf32>, vector<32x16xf32> -> vector<32x16xf32>
    %c0_4 = arith.constant 0 : index
    %c0_5 = arith.constant 0 : index
    %6 = vector.load %arg7[%c0_4, %c0_5] : memref<32x16xf32, #tpu.memory_space<vmem>>, vector<32x16xf32>
    tpu.vector_store %arg7[%c0_4, %c0_5], %5 {strides = array<i32>} : memref<32x16xf32, #tpu.memory_space<vmem>>, vector<32x16xf32>,
    %c32_i32 = arith.constant 32 : i32
    %7 = arith.muli %arg0, %c32_i32 : i32
    %c0_i32_6 = arith.constant 0 : i32
    %c32_i32_7 = arith.constant 32 : i32
    %8 = arith.addi %c0_i32_6, %c32_i32_7 : i32
    %c1_i32 = arith.constant 1 : i32
    scf.for %arg8 = %c0_i32_6 to %8 step %c1_i32  : i32 {
      %9 = arith.addi %7, %arg8 : i32
      %10 = arith.index_cast %9 : i32 to index
      %11 = memref.load %arg1[%10] : memref<32xi32, #tpu.memory_space<smem>>
      %12 = arith.addi %7, %arg8 : i32
      %13 = arith.index_cast %12 : i32 to index
      %14 = memref.load %arg2[%13] : memref<32xi32, #tpu.memory_space<smem>>
      %15 = arith.index_cast %11 : i32 to index
      %c0_9 = arith.constant 0 : index
      %16 = vector.load %arg4[%15, %c0_9] : memref<16x16xf32, #tpu.memory_space<vmem>>, vector<1x16xf32>
      %17 = arith.index_cast %arg8 : i32 to index
      %c0_10 = arith.constant 0 : index
      %18 = vector.load %arg7[%17, %c0_10] : memref<32x16xf32, #tpu.memory_space<vmem>>, vector<1x16xf32>
      %19 = arith.mulf %16, %18 : vector<1x16xf32>
      %20 = arith.index_cast %14 : i32 to index
      %c0_11 = arith.constant 0 : index
      %21 = vector.load %arg6[%20, %c0_11] : memref<16x16xf32, #tpu.memory_space<vmem>>, vector<1x16xf32>
      %22 = arith.addf %21, %19 : vector<1x16xf32>
      %23 = arith.index_cast %14 : i32 to index
      %c0_12 = arith.constant 0 : index
      %24 = vector.load %arg6[%23, %c0_12] : memref<16x16xf32, #tpu.memory_space<vmem>>, vector<1x16xf32>
      tpu.vector_store %arg6[%23, %c0_12], %22 {strides = array<i32>} : memref<16x16xf32, #tpu.memory_space<vmem>>, vector<1x16xf32>,
    }
    %c32_i32_8 = arith.constant 32 : i32
    return
  }
  func.func @transform_0(%arg0: i32, %arg1: memref<32xi32, #tpu.memory_space<smem>>, %arg2: memref<32xi32, #tpu.memory_space<smem>>) -> (i32, i32) {
    %c0_i32 = arith.constant 0 : i32
    %c0_i32_0 = arith.constant 0 : i32
    return %arg0, %c0_i32 : i32, i32
  }
  func.func @transform_1(%arg0: i32, %arg1: memref<32xi32, #tpu.memory_space<smem>>, %arg2: memref<32xi32, #tpu.memory_space<smem>>) -> (i32, i32) {
    %c0_i32 = arith.constant 0 : i32
    %c0_i32_0 = arith.constant 0 : i32
    %c0_i32_1 = arith.constant 0 : i32
    return %c0_i32, %c0_i32_0 : i32, i32
  }
  func.func @transform_2(%arg0: i32, %arg1: memref<32xi32, #tpu.memory_space<smem>>, %arg2: memref<32xi32, #tpu.memory_space<smem>>) -> (i32, i32) {
    %c0_i32 = arith.constant 0 : i32
    %c0_i32_0 = arith.constant 0 : i32
    %c0_i32_1 = arith.constant 0 : i32
    return %c0_i32, %c0_i32_0 : i32, i32
  }
  func.func @transform_3(%arg0: i32, %arg1: memref<32xi32, #tpu.memory_space<smem>>, %arg2: memref<32xi32, #tpu.memory_space<smem>>) -> (i32, i32) {
    %c0_i32 = arith.constant 0 : i32
    %c0_i32_0 = arith.constant 0 : i32
    %c0_i32_1 = arith.constant 0 : i32
    return %c0_i32, %c0_i32_0 : i32, i32
  }
}

module attributes {stable_mosaic.version = 11 : i64} {
  func.func @edge_update_kernel(%arg0: i32, %arg1: memref<16x16xf32, #tpu.memory_space<vmem>>, %arg2: memref<16x32xf32, #tpu.memory_space<vmem>>, %arg3: memref<16x32xf32, #tpu.memory_space<vmem>>, %arg4: memref<16x32xf32, #tpu.memory_space<vmem>>, %arg5: memref<1x32x32xf32, #tpu.memory_space<vmem>>, %arg6: memref<1x1x32xf32, #tpu.memory_space<vmem>>, %arg7: memref<1x32x32xf32, #tpu.memory_space<vmem>>, %arg8: memref<1x1x32xf32, #tpu.memory_space<vmem>>, %arg9: memref<32x32xf32, #tpu.memory_space<vmem>>, %arg10: memref<1x32xf32, #tpu.memory_space<vmem>>, %arg11: memref<2x32x32xf32, #tpu.memory_space<vmem>>, %arg12: memref<2x1x32xf32, #tpu.memory_space<vmem>>, %arg13: memref<2x32x32xf32, #tpu.memory_space<vmem>>, %arg14: memref<2x1x32xf32, #tpu.memory_space<vmem>>, %arg15: memref<16x32xf32, #tpu.memory_space<vmem>>) attributes {dimension_semantics = [#tpu.dimension_semantics<parallel>], iteration_bounds = array<i64: 1>, scalar_prefetch = 0 : i64, scratch_operands = 0 : i64, tpu.core_type = #tpu.core_type<tc>, window_params = [{transform_indices = @transform_0, window_bounds = array<i64: 16, 16>}, {transform_indices = @transform_1, window_bounds = array<i64: 16, 32>}, {transform_indices = @transform_2, window_bounds = array<i64: 16, 32>}, {pipeline_mode = #tpu.pipeline_mode<synchronous>, transform_indices = @transform_3, window_bounds = array<i64: 16, 32>}, {pipeline_mode = #tpu.pipeline_mode<synchronous>, transform_indices = @transform_4, window_bounds = array<i64: 1, 32, 32>}, {pipeline_mode = #tpu.pipeline_mode<synchronous>, transform_indices = @transform_5, window_bounds = array<i64: 1, 1, 32>}, {pipeline_mode = #tpu.pipeline_mode<synchronous>, transform_indices = @transform_6, window_bounds = array<i64: 1, 32, 32>}, {pipeline_mode = #tpu.pipeline_mode<synchronous>, transform_indices = @transform_7, window_bounds = array<i64: 1, 1, 32>}, {pipeline_mode = #tpu.pipeline_mode<synchronous>, transform_indices = @transform_8, window_bounds = array<i64: 32, 32>}, {pipeline_mode = #tpu.pipeline_mode<synchronous>, transform_indices = @transform_9, window_bounds = array<i64: 1, 32>}, {pipeline_mode = #tpu.pipeline_mode<synchronous>, transform_indices = @transform_10, window_bounds = array<i64: 2, 32, 32>}, {pipeline_mode = #tpu.pipeline_mode<synchronous>, transform_indices = @transform_11, window_bounds = array<i64: 2, 1, 32>}, {pipeline_mode = #tpu.pipeline_mode<synchronous>, transform_indices = @transform_12, window_bounds = array<i64: 2, 32, 32>}, {pipeline_mode = #tpu.pipeline_mode<synchronous>, transform_indices = @transform_13, window_bounds = array<i64: 2, 1, 32>}, {transform_indices = @transform_14, window_bounds = array<i64: 16, 32>}]} {
    %c0 = arith.constant 0 : index
    %c0_0 = arith.constant 0 : index
    %0 = vector.load %arg1[%c0, %c0_0] : memref<16x16xf32, #tpu.memory_space<vmem>>, vector<16x16xf32>
    %c0_1 = arith.constant 0 : index
    %c0_2 = arith.constant 0 : index
    %1 = vector.load %arg4[%c0_1, %c0_2] : memref<16x32xf32, #tpu.memory_space<vmem>>, vector<16x32xf32>
    %cst = arith.constant dense<0.000000e+00> : vector<16x32xf32>
    %2 = tpu.matmul %0, %1, %cst {dimension_numbers = #tpu.dot_dimension_numbers<[1], [0], [0], [1], [0, 0, 1, 1], [], []>} : vector<16x16xf32>, vector<16x32xf32>, vector<16x32xf32> -> vector<16x32xf32>
    %3 = arith.negf %2 : vector<16x32xf32>
    %4 = math.exp %3 : vector<16x32xf32>
    %cst_3 = arith.constant 1.000000e+00 : f32
    %5 = vector.broadcast %cst_3 : f32 to vector<16x32xf32>
    %6 = arith.addf %5, %4 : vector<16x32xf32>
    %7 = arith.divf %5, %6 : vector<16x32xf32>
    %8 = arith.mulf %2, %7 : vector<16x32xf32>
    %c0_4 = arith.constant 0 : index
    %c0_5 = arith.constant 0 : index
    %9 = vector.load %arg2[%c0_4, %c0_5] : memref<16x32xf32, #tpu.memory_space<vmem>>, vector<16x32xf32>
    %10 = arith.addf %8, %9 : vector<16x32xf32>
    %c0_6 = arith.constant 0 : index
    %c0_7 = arith.constant 0 : index
    %c0_8 = arith.constant 0 : index
    %11 = vector.load %arg5[%c0_6, %c0_7, %c0_8] : memref<1x32x32xf32, #tpu.memory_space<vmem>>, vector<1x32x32xf32>
    %12 = vector.shape_cast %11 : vector<1x32x32xf32> to vector<32x32xf32>
    %cst_9 = arith.constant dense<0.000000e+00> : vector<16x32xf32>
    %13 = tpu.matmul %10, %12, %cst_9 {dimension_numbers = #tpu.dot_dimension_numbers<[1], [0], [0], [1], [0, 0, 1, 1], [], []>} : vector<16x32xf32>, vector<32x32xf32>, vector<16x32xf32> -> vector<16x32xf32>
    %c0_10 = arith.constant 0 : index
    %c0_11 = arith.constant 0 : index
    %c0_12 = arith.constant 0 : index
    %14 = vector.load %arg6[%c0_10, %c0_11, %c0_12] : memref<1x1x32xf32, #tpu.memory_space<vmem>>, vector<1x1x32xf32>
    %15 = vector.shape_cast %14 : vector<1x1x32xf32> to vector<1x32xf32>
    %16 = vector.broadcast %15 : vector<1x32xf32> to vector<16x32xf32>
    %17 = arith.addf %13, %16 : vector<16x32xf32>
    %18 = arith.negf %17 : vector<16x32xf32>
    %19 = math.exp %18 : vector<16x32xf32>
    %cst_13 = arith.constant 1.000000e+00 : f32
    %20 = vector.broadcast %cst_13 : f32 to vector<16x32xf32>
    %21 = arith.addf %20, %19 : vector<16x32xf32>
    %22 = arith.divf %20, %21 : vector<16x32xf32>
    %23 = arith.mulf %17, %22 : vector<16x32xf32>
    %c0_14 = arith.constant 0 : index
    %c0_15 = arith.constant 0 : index
    %c0_16 = arith.constant 0 : index
    %24 = vector.load %arg7[%c0_14, %c0_15, %c0_16] : memref<1x32x32xf32, #tpu.memory_space<vmem>>, vector<1x32x32xf32>
    %25 = vector.shape_cast %24 : vector<1x32x32xf32> to vector<32x32xf32>
    %cst_17 = arith.constant dense<0.000000e+00> : vector<16x32xf32>
    %26 = tpu.matmul %23, %25, %cst_17 {dimension_numbers = #tpu.dot_dimension_numbers<[1], [0], [0], [1], [0, 0, 1, 1], [], []>} : vector<16x32xf32>, vector<32x32xf32>, vector<16x32xf32> -> vector<16x32xf32>
    %c0_18 = arith.constant 0 : index
    %c0_19 = arith.constant 0 : index
    %c0_20 = arith.constant 0 : index
    %27 = vector.load %arg8[%c0_18, %c0_19, %c0_20] : memref<1x1x32xf32, #tpu.memory_space<vmem>>, vector<1x1x32xf32>
    %28 = vector.shape_cast %27 : vector<1x1x32xf32> to vector<1x32xf32>
    %29 = vector.broadcast %28 : vector<1x32xf32> to vector<16x32xf32>
    %30 = arith.addf %26, %29 : vector<16x32xf32>
    %31 = arith.negf %30 : vector<16x32xf32>
    %32 = math.exp %31 : vector<16x32xf32>
    %cst_21 = arith.constant 1.000000e+00 : f32
    %33 = vector.broadcast %cst_21 : f32 to vector<16x32xf32>
    %34 = arith.addf %33, %32 : vector<16x32xf32>
    %35 = arith.divf %33, %34 : vector<16x32xf32>
    %36 = arith.mulf %30, %35 : vector<16x32xf32>
    %37 = arith.addf %10, %36 : vector<16x32xf32>
    %c0_22 = arith.constant 0 : index
    %c0_23 = arith.constant 0 : index
    %38 = vector.load %arg9[%c0_22, %c0_23] : memref<32x32xf32, #tpu.memory_space<vmem>>, vector<32x32xf32>
    %cst_24 = arith.constant dense<0.000000e+00> : vector<16x32xf32>
    %39 = tpu.matmul %37, %38, %cst_24 {dimension_numbers = #tpu.dot_dimension_numbers<[1], [0], [0], [1], [0, 0, 1, 1], [], []>} : vector<16x32xf32>, vector<32x32xf32>, vector<16x32xf32> -> vector<16x32xf32>
    %c0_25 = arith.constant 0 : index
    %c0_26 = arith.constant 0 : index
    %40 = vector.load %arg10[%c0_25, %c0_26] : memref<1x32xf32, #tpu.memory_space<vmem>>, vector<1x32xf32>
    %41 = vector.broadcast %40 : vector<1x32xf32> to vector<16x32xf32>
    %42 = arith.addf %39, %41 : vector<16x32xf32>
    %43 = arith.negf %42 : vector<16x32xf32>
    %44 = math.exp %43 : vector<16x32xf32>
    %cst_27 = arith.constant 1.000000e+00 : f32
    %45 = vector.broadcast %cst_27 : f32 to vector<16x32xf32>
    %46 = arith.addf %45, %44 : vector<16x32xf32>
    %47 = arith.divf %45, %46 : vector<16x32xf32>
    %48 = arith.mulf %42, %47 : vector<16x32xf32>
    %c0_28 = arith.constant 0 : index
    %c0_29 = arith.constant 0 : index
    %49 = vector.load %arg3[%c0_28, %c0_29] : memref<16x32xf32, #tpu.memory_space<vmem>>, vector<16x32xf32>
    %50 = arith.addf %49, %48 : vector<16x32xf32>
    %c0_30 = arith.constant 0 : index
    %c0_31 = arith.constant 0 : index
    %c0_32 = arith.constant 0 : index
    %51 = vector.load %arg11[%c0_30, %c0_31, %c0_32] : memref<2x32x32xf32, #tpu.memory_space<vmem>>, vector<1x32x32xf32>
    %52 = vector.shape_cast %51 : vector<1x32x32xf32> to vector<32x32xf32>
    %cst_33 = arith.constant dense<0.000000e+00> : vector<16x32xf32>
    %53 = tpu.matmul %50, %52, %cst_33 {dimension_numbers = #tpu.dot_dimension_numbers<[1], [0], [0], [1], [0, 0, 1, 1], [], []>} : vector<16x32xf32>, vector<32x32xf32>, vector<16x32xf32> -> vector<16x32xf32>
    %c0_34 = arith.constant 0 : index
    %c0_35 = arith.constant 0 : index
    %c0_36 = arith.constant 0 : index
    %54 = vector.load %arg12[%c0_34, %c0_35, %c0_36] : memref<2x1x32xf32, #tpu.memory_space<vmem>>, vector<1x1x32xf32>
    %55 = vector.shape_cast %54 : vector<1x1x32xf32> to vector<1x32xf32>
    %56 = vector.broadcast %55 : vector<1x32xf32> to vector<16x32xf32>
    %57 = arith.addf %53, %56 : vector<16x32xf32>
    %58 = arith.negf %57 : vector<16x32xf32>
    %59 = math.exp %58 : vector<16x32xf32>
    %cst_37 = arith.constant 1.000000e+00 : f32
    %60 = vector.broadcast %cst_37 : f32 to vector<16x32xf32>
    %61 = arith.addf %60, %59 : vector<16x32xf32>
    %62 = arith.divf %60, %61 : vector<16x32xf32>
    %63 = arith.mulf %57, %62 : vector<16x32xf32>
    %c0_38 = arith.constant 0 : index
    %c0_39 = arith.constant 0 : index
    %c0_40 = arith.constant 0 : index
    %64 = vector.load %arg13[%c0_38, %c0_39, %c0_40] : memref<2x32x32xf32, #tpu.memory_space<vmem>>, vector<1x32x32xf32>
    %65 = vector.shape_cast %64 : vector<1x32x32xf32> to vector<32x32xf32>
    %cst_41 = arith.constant dense<0.000000e+00> : vector<16x32xf32>
    %66 = tpu.matmul %63, %65, %cst_41 {dimension_numbers = #tpu.dot_dimension_numbers<[1], [0], [0], [1], [0, 0, 1, 1], [], []>} : vector<16x32xf32>, vector<32x32xf32>, vector<16x32xf32> -> vector<16x32xf32>
    %c0_42 = arith.constant 0 : index
    %c0_43 = arith.constant 0 : index
    %c0_44 = arith.constant 0 : index
    %67 = vector.load %arg14[%c0_42, %c0_43, %c0_44] : memref<2x1x32xf32, #tpu.memory_space<vmem>>, vector<1x1x32xf32>
    %68 = vector.shape_cast %67 : vector<1x1x32xf32> to vector<1x32xf32>
    %69 = vector.broadcast %68 : vector<1x32xf32> to vector<16x32xf32>
    %70 = arith.addf %66, %69 : vector<16x32xf32>
    %71 = arith.negf %70 : vector<16x32xf32>
    %72 = math.exp %71 : vector<16x32xf32>
    %cst_45 = arith.constant 1.000000e+00 : f32
    %73 = vector.broadcast %cst_45 : f32 to vector<16x32xf32>
    %74 = arith.addf %73, %72 : vector<16x32xf32>
    %75 = arith.divf %73, %74 : vector<16x32xf32>
    %76 = arith.mulf %70, %75 : vector<16x32xf32>
    %77 = arith.addf %50, %76 : vector<16x32xf32>
    %c1 = arith.constant 1 : index
    %c0_46 = arith.constant 0 : index
    %c0_47 = arith.constant 0 : index
    %78 = vector.load %arg11[%c1, %c0_46, %c0_47] : memref<2x32x32xf32, #tpu.memory_space<vmem>>, vector<1x32x32xf32>
    %79 = vector.shape_cast %78 : vector<1x32x32xf32> to vector<32x32xf32>
    %cst_48 = arith.constant dense<0.000000e+00> : vector<16x32xf32>
    %80 = tpu.matmul %77, %79, %cst_48 {dimension_numbers = #tpu.dot_dimension_numbers<[1], [0], [0], [1], [0, 0, 1, 1], [], []>} : vector<16x32xf32>, vector<32x32xf32>, vector<16x32xf32> -> vector<16x32xf32>
    %c1_49 = arith.constant 1 : index
    %c0_50 = arith.constant 0 : index
    %c0_51 = arith.constant 0 : index
    %81 = vector.load %arg12[%c1_49, %c0_50, %c0_51] : memref<2x1x32xf32, #tpu.memory_space<vmem>>, vector<1x1x32xf32>
    %82 = vector.shape_cast %81 : vector<1x1x32xf32> to vector<1x32xf32>
    %83 = vector.broadcast %82 : vector<1x32xf32> to vector<16x32xf32>
    %84 = arith.addf %80, %83 : vector<16x32xf32>
    %85 = arith.negf %84 : vector<16x32xf32>
    %86 = math.exp %85 : vector<16x32xf32>
    %cst_52 = arith.constant 1.000000e+00 : f32
    %87 = vector.broadcast %cst_52 : f32 to vector<16x32xf32>
    %88 = arith.addf %87, %86 : vector<16x32xf32>
    %89 = arith.divf %87, %88 : vector<16x32xf32>
    %90 = arith.mulf %84, %89 : vector<16x32xf32>
    %c1_53 = arith.constant 1 : index
    %c0_54 = arith.constant 0 : index
    %c0_55 = arith.constant 0 : index
    %91 = vector.load %arg13[%c1_53, %c0_54, %c0_55] : memref<2x32x32xf32, #tpu.memory_space<vmem>>, vector<1x32x32xf32>
    %92 = vector.shape_cast %91 : vector<1x32x32xf32> to vector<32x32xf32>
    %cst_56 = arith.constant dense<0.000000e+00> : vector<16x32xf32>
    %93 = tpu.matmul %90, %92, %cst_56 {dimension_numbers = #tpu.dot_dimension_numbers<[1], [0], [0], [1], [0, 0, 1, 1], [], []>} : vector<16x32xf32>, vector<32x32xf32>, vector<16x32xf32> -> vector<16x32xf32>
    %c1_57 = arith.constant 1 : index
    %c0_58 = arith.constant 0 : index
    %c0_59 = arith.constant 0 : index
    %94 = vector.load %arg14[%c1_57, %c0_58, %c0_59] : memref<2x1x32xf32, #tpu.memory_space<vmem>>, vector<1x1x32xf32>
    %95 = vector.shape_cast %94 : vector<1x1x32xf32> to vector<1x32xf32>
    %96 = vector.broadcast %95 : vector<1x32xf32> to vector<16x32xf32>
    %97 = arith.addf %93, %96 : vector<16x32xf32>
    %98 = arith.negf %97 : vector<16x32xf32>
    %99 = math.exp %98 : vector<16x32xf32>
    %cst_60 = arith.constant 1.000000e+00 : f32
    %100 = vector.broadcast %cst_60 : f32 to vector<16x32xf32>
    %101 = arith.addf %100, %99 : vector<16x32xf32>
    %102 = arith.divf %100, %101 : vector<16x32xf32>
    %103 = arith.mulf %97, %102 : vector<16x32xf32>
    %104 = arith.addf %77, %103 : vector<16x32xf32>
    %c0_61 = arith.constant 0 : index
    %c0_62 = arith.constant 0 : index
    %105 = vector.load %arg15[%c0_61, %c0_62] : memref<16x32xf32, #tpu.memory_space<vmem>>, vector<16x32xf32>
    tpu.vector_store %arg15[%c0_61, %c0_62], %104 {strides = array<i32>} : memref<16x32xf32, #tpu.memory_space<vmem>>, vector<16x32xf32>,
    return
  }
  func.func @transform_0(%arg0: i32) -> (i32, i32) {
    %c0_i32 = arith.constant 0 : i32
    %c0_i32_0 = arith.constant 0 : i32
    return %arg0, %c0_i32 : i32, i32
  }
  func.func @transform_1(%arg0: i32) -> (i32, i32) {
    %c0_i32 = arith.constant 0 : i32
    %c0_i32_0 = arith.constant 0 : i32
    return %arg0, %c0_i32 : i32, i32
  }
  func.func @transform_2(%arg0: i32) -> (i32, i32) {
    %c0_i32 = arith.constant 0 : i32
    %c0_i32_0 = arith.constant 0 : i32
    return %arg0, %c0_i32 : i32, i32
  }
  func.func @transform_3(%arg0: i32) -> (i32, i32) {
    %c0_i32 = arith.constant 0 : i32
    %c0_i32_0 = arith.constant 0 : i32
    %c0_i32_1 = arith.constant 0 : i32
    return %c0_i32, %c0_i32_0 : i32, i32
  }
  func.func @transform_4(%arg0: i32) -> (i32, i32, i32) {
    %c0_i32 = arith.constant 0 : i32
    %c0_i32_0 = arith.constant 0 : i32
    %c0_i32_1 = arith.constant 0 : i32
    %c0_i32_2 = arith.constant 0 : i32
    return %c0_i32, %c0_i32_0, %c0_i32_1 : i32, i32, i32
  }
  func.func @transform_5(%arg0: i32) -> (i32, i32, i32) {
    %c0_i32 = arith.constant 0 : i32
    %c0_i32_0 = arith.constant 0 : i32
    %c0_i32_1 = arith.constant 0 : i32
    %c0_i32_2 = arith.constant 0 : i32
    return %c0_i32, %c0_i32_0, %c0_i32_1 : i32, i32, i32
  }
  func.func @transform_6(%arg0: i32) -> (i32, i32, i32) {
    %c0_i32 = arith.constant 0 : i32
    %c0_i32_0 = arith.constant 0 : i32
    %c0_i32_1 = arith.constant 0 : i32
    %c0_i32_2 = arith.constant 0 : i32
    return %c0_i32, %c0_i32_0, %c0_i32_1 : i32, i32, i32
  }
  func.func @transform_7(%arg0: i32) -> (i32, i32, i32) {
    %c0_i32 = arith.constant 0 : i32
    %c0_i32_0 = arith.constant 0 : i32
    %c0_i32_1 = arith.constant 0 : i32
    %c0_i32_2 = arith.constant 0 : i32
    return %c0_i32, %c0_i32_0, %c0_i32_1 : i32, i32, i32
  }
  func.func @transform_8(%arg0: i32) -> (i32, i32) {
    %c0_i32 = arith.constant 0 : i32
    %c0_i32_0 = arith.constant 0 : i32
    %c0_i32_1 = arith.constant 0 : i32
    return %c0_i32, %c0_i32_0 : i32, i32
  }
  func.func @transform_9(%arg0: i32) -> (i32, i32) {
    %c0_i32 = arith.constant 0 : i32
    %c0_i32_0 = arith.constant 0 : i32
    %c0_i32_1 = arith.constant 0 : i32
    return %c0_i32, %c0_i32_0 : i32, i32
  }
  func.func @transform_10(%arg0: i32) -> (i32, i32, i32) {
    %c0_i32 = arith.constant 0 : i32
    %c0_i32_0 = arith.constant 0 : i32
    %c0_i32_1 = arith.constant 0 : i32
    %c0_i32_2 = arith.constant 0 : i32
    return %c0_i32, %c0_i32_0, %c0_i32_1 : i32, i32, i32
  }
  func.func @transform_11(%arg0: i32) -> (i32, i32, i32) {
    %c0_i32 = arith.constant 0 : i32
    %c0_i32_0 = arith.constant 0 : i32
    %c0_i32_1 = arith.constant 0 : i32
    %c0_i32_2 = arith.constant 0 : i32
    return %c0_i32, %c0_i32_0, %c0_i32_1 : i32, i32, i32
  }
  func.func @transform_12(%arg0: i32) -> (i32, i32, i32) {
    %c0_i32 = arith.constant 0 : i32
    %c0_i32_0 = arith.constant 0 : i32
    %c0_i32_1 = arith.constant 0 : i32
    %c0_i32_2 = arith.constant 0 : i32
    return %c0_i32, %c0_i32_0, %c0_i32_1 : i32, i32, i32
  }
  func.func @transform_13(%arg0: i32) -> (i32, i32, i32) {
    %c0_i32 = arith.constant 0 : i32
    %c0_i32_0 = arith.constant 0 : i32
    %c0_i32_1 = arith.constant 0 : i32
    %c0_i32_2 = arith.constant 0 : i32
    return %c0_i32, %c0_i32_0, %c0_i32_1 : i32, i32, i32
  }
  func.func @transform_14(%arg0: i32) -> (i32, i32) {
    %c0_i32 = arith.constant 0 : i32
    %c0_i32_0 = arith.constant 0 : i32
    return %arg0, %c0_i32 : i32, i32
  }
}

</mosaic_0001>

<llo_original>
// kernel: interaction_pp_block.4
$region0: #{interaction_pp_block.4}
  #allocation0 [shape = 'u32[]', space=smem, size = 0x4, offset = 0x4, fixed_abs, tag = 'smem constant byte address 0x4 - core index']
  #allocation1 [shape = 'u32[72,128]{1,0:T(1,128)}', space=vmem, size = 0x9000, scoped, tag = 'internal scratch']
  #allocation2 [shape = 'f32[32,16]{1,0:T(8,128)}', space=vmem, size = 0x4000, scoped, tag = 'scratch operand']
  #allocation3 [shape = 's32[1]{0}', space=sflag, size = 0x4, scoped, tag = 'scoped memory for interaction_pp_block.4']
  #allocation4 [shape = 'u8[512]{0}', space=smem, size = 0x200, scoped, tag = 'prefetched SMEM operand 0']
  #allocation5 [shape = 'u8[512]{0}', space=smem, size = 0x200, scoped, tag = 'prefetched SMEM operand 1']
  %s0 = inlined_call_operand.vmem [shape: s32[32], index: 0, kind: input, shape index: {}]
  %s1 = inlined_call_operand.hbm [shape: s32[32], index: 1, kind: input, shape index: {}]
  %s2 = inlined_call_operand.hbm [shape: f32[32,32], index: 2, kind: input, shape index: {}]
  %s3 = inlined_call_operand.vmem [shape: f32[16,16], index: 3, kind: input, shape index: {}]
  %s4 = inlined_call_operand.vmem [shape: f32[32,16], index: 4, kind: input, shape index: {}]
  %s5 = inlined_call_operand.vmem [shape: f32[16,16], index: 5, kind: output, shape index: {}]
  %s6 = sld [smem:[#allocation0]]
  $region37: #{interaction_pp_block.4} parent=0
    _
  %s8 = ssub.s32 1, %s6
  %s9 = scalar_select 0, %s8, %s6
  %s11 = sshll.u32 %s0, 4
  %s12 = int_to_ptr.vmem [resolvable:$true] %s11
  %14 = dma.vmem_to_smem %s12, 16, [#allocation4], [#allocation3]
  %s16 = sshll.u32 %s1, 4
  %s17 = int_to_ptr.hbm [resolvable:$true] %s16
  %19 = dma.hbm_to_smem %s17, 16, [#allocation5], [#allocation3]
  %21 = dma.done [#allocation3], 32
  %22 = sfence
  $region1: #{interaction_pp_block.4} parent=0
    #allocation6 [shape = 'u8[16384]{0}', space=vmem, size = 0x4000, scoped, tag = 'input window, operand 2, single buffered']
    #allocation7 [shape = 's32[1]{0}', space=sflag, size = 0x4, scoped, tag = 'scoped memory for interaction_pp_block.4']
    %23 = vsyncpa [#allocation7], 0
    // Predicated region
    $region2: #{interaction_pp_block.4} parent=1 // pred_check
      _
    $region3: #{interaction_pp_block.4} parent=1 // pred_check_branch
      %25 = sbr.rel (0) target = $region5
    $region4: #{interaction_pp_block.4} parent=1 // pred_region
      %27 = vsyncadd [#allocation7], 0
      %s28 = sshll.u32 %s2, 4
      %s29 = int_to_ptr.hbm [resolvable:$true] %s28
      %s30 = sshll.u32 [#allocation6], 4
      %s31 = int_to_ptr.vmem [resolvable:$true] %s30
      %36 = dma.hbm_to_vmem [thread:$0]  %s29, 512, %s31, [#allocation7], 128, 128, 8
    $region5: #{interaction_pp_block.4} parent=1 // pred_fallthru
      _
    // Predicated region
    $region6: #{interaction_pp_block.4} parent=1 // pred_check
      _
    $region7: #{interaction_pp_block.4} parent=1 // pred_check_branch
      %38 = sbr.rel (0) target = $region9
    $region8: #{interaction_pp_block.4} parent=1 // pred_region
      _
    $region9: #{interaction_pp_block.4} parent=1 // pred_fallthru
      _
    // Predicated region
    $region10: #{interaction_pp_block.4} parent=1 // pred_check
      _
    $region11: #{interaction_pp_block.4} parent=1 // pred_check_branch
      %40 = sbr.rel (0) target = $region13
    $region12: #{interaction_pp_block.4} parent=1 // pred_region
      _
    $region13: #{interaction_pp_block.4} parent=1 // pred_fallthru
      _
    // Predicated region
    $region14: #{interaction_pp_block.4} parent=1 // pred_check
      _
    $region15: #{interaction_pp_block.4} parent=1 // pred_check_branch
      %42 = sbr.rel (0) target = $region17
    $region16: #{interaction_pp_block.4} parent=1 // pred_region
      %44 = dma.done [#allocation7], 512
    $region17: #{interaction_pp_block.4} parent=1 // pred_fallthru
      _
    %p45 = scmp.eq.s32.totalorder 0, 0
    // Predicated region
    $region18: #{interaction_pp_block.4} parent=1 // pred_check
      %p46 = pneg %p45
    $region19: #{interaction_pp_block.4} parent=1 // pred_check_branch
      %48 = sbr.rel (%p46) target = $region21
    $region20: #{interaction_pp_block.4} parent=1 // pred_region
      %vm49 = vcmask 130048
      %50 = vst.msk [vmem:[%s5] sm:$0xff] %vm49, 0.0
      %51 = vst.msk [vmem:[%s5 + $0x8] sm:$0xff] %vm49, 0.0
    $region21: #{interaction_pp_block.4} parent=1 // pred_fallthru
      _
    %v52 = vld [vmem:[#allocation6] sm:$0xff]
    %v53 = vld [vmem:[#allocation6 + $0x8] sm:$0xff]
    %v54 = vld [vmem:[#allocation6 + $0x10] sm:$0xff]
    %v55 = vld [vmem:[#allocation6 + $0x18] sm:$0xff]
    %v56 = vld [vmem:[%s4] sm:$0xff]
    %v57 = vld [vmem:[%s4 + $0x8] sm:$0xff]
    %v58 = vld [vmem:[%s4 + $0x10] sm:$0xff]
    %v59 = vld [vmem:[%s4 + $0x18] sm:$0xff]
    %vm60 = vcmask 261120
    %v62 = vsel %vm60, %v52, 0
    %v65 = vsel %vm60, %v53, 0
    %v68 = vsel %vm60, %v54, 0
    %v71 = vsel %vm60, %v55, 0
    %73 = vmatpush.msra.mxu0 0.0
    %74 = vmatpush.msra.mxu0 0.0
    %75 = vmatpush.msra.mxu0 0.0
    %76 = vmatpush.msra.mxu0 0.0
    %77 = vmatpush.msra.mxu0 0.0
    %78 = vmatpush.msra.mxu0 0.0
    %79 = vmatpush.msra.mxu0 0.0
    %80 = vmatpush.msra.mxu0 0.0
    %81 = vmatpush.msra.mxu0 0.0
    %82 = vmatpush.msra.mxu0 0.0
    %83 = vmatpush.msra.mxu0 0.0
    %84 = vmatpush.msra.mxu0 0.0
    %85 = vmatpush.msra.mxu0 %v59
    %86 = vmatpush.msra.mxu0 %v58
    %87 = vmatpush.msra.mxu0 %v57
    %88 = vmatpush.msra.mxu0 %v56
    %89 = vmatmul.f32.gmra.mxu0 %v62
    %v90 = vpop.f32.mrf.mxu0
    %v91 = vadd.f32 0.0, %v90
    %92 = vmatmul.f32.gmra.mxu0 %v65
    %v93 = vpop.f32.mrf.mxu0
    %v94 = vadd.f32 0.0, %v93
    %95 = vmatmul.f32.gmra.mxu0 %v68
    %v96 = vpop.f32.mrf.mxu0
    %v97 = vadd.f32 0.0, %v96
    %98 = vmatmul.f32.gmra.mxu0 %v71
    %v99 = vpop.f32.mrf.mxu0
    %v100 = vadd.f32 0.0, %v99
    %101 = vdwg.mxu0
    %vm102 = vcmask 130048
    %103 = vst.msk [vmem:[#allocation2] sm:$0xff] %vm102, %v91
    %104 = vst.msk [vmem:[#allocation2 + $0x8] sm:$0xff] %vm102, %v94
    %105 = vst.msk [vmem:[#allocation2 + $0x10] sm:$0xff] %vm102, %v97
    %106 = vst.msk [vmem:[#allocation2 + $0x18] sm:$0xff] %vm102, %v100
    %s107 = smul.u32 0, 32
    loop: start=0, step=1, limit=32
    $region22: #{interaction_pp_block.4} parent=1 // loop_pre_header
      _
    $region23: #{interaction_pp_block.4} parent=1 // loop_header
      %s109 = sphi 0, %s113
      %p110 = scmp.ge.s32.totalorder %s109, 32
    $region24: #{interaction_pp_block.4} parent=1 // loop_header_branch
      %112 = sbr.rel (%p110) target = $region28
    $region25: #{interaction_pp_block.4} parent=1 // loop_body
      %s114 = sadd.s32 %s107, %s109
      %s115 = sld [smem:[#allocation4 + %s114]]
      %s116 = sld [smem:[#allocation5 + %s114]]
      %s117 = scalar_lea.vmem %s3, %s115
      %v118 = vld [vmem:[%s117] sm:$0x1]
      %s119 = scalar_lea.vmem [#allocation2], %s109
      %v120 = vld [vmem:[%s119] sm:$0x1]
      %v121 = vmul.f32 %v118, %v120
      %s122 = scalar_lea.vmem %s5, %s116
      %v123 = vld [vmem:[%s122] sm:$0x1]
      %v124 = vadd.f32 %v123, %v121
      %vm125 = vcmask 122880
      %126 = vst.msk [vmem:[%s122] sm:$0x1] %vm125, %v124
    $region26: #{interaction_pp_block.4} parent=1 // loop_footer
      %s113 = sadd.s32 1, %s109
    $region27: #{interaction_pp_block.4} parent=1 // loop_footer_branch
      %108 = sbr.rel target = $region23
    $region28: #{interaction_pp_block.4} parent=1 // loop_exit
      _
    // Predicated region
    $region29: #{interaction_pp_block.4} parent=1 // pred_check
      _
    $region30: #{interaction_pp_block.4} parent=1 // pred_check_branch
      %128 = sbr.rel (0) target = $region32
    $region31: #{interaction_pp_block.4} parent=1 // pred_region
      _
    $region32: #{interaction_pp_block.4} parent=1 // pred_fallthru
      _
    // Predicated region
    $region33: #{interaction_pp_block.4} parent=1 // pred_check
      _
    $region34: #{interaction_pp_block.4} parent=1 // pred_check_branch
      %130 = sbr.rel (0) target = $region36
    $region35: #{interaction_pp_block.4} parent=1 // pred_region
      _
    $region36: #{interaction_pp_block.4} parent=1 // pred_fallthru
      _
    %131 = vsyncpa [#allocation7], 1

// kernel: interaction_pp_block.3
$region0: #{interaction_pp_block.3}
  #allocation0 [shape = 'u32[]', space=smem, size = 0x4, offset = 0x4, fixed_abs, tag = 'smem constant byte address 0x4 - core index']
  #allocation1 [shape = 'u32[72,128]{1,0:T(1,128)}', space=vmem, size = 0x9000, scoped, tag = 'internal scratch']
  %s0 = inlined_call_operand.vmem [shape: f32[16,8], index: 0, kind: input, shape index: {}]
  %s1 = inlined_call_operand.vmem [shape: f32[16,32], index: 1, kind: input, shape index: {}]
  %s2 = inlined_call_operand.vmem [shape: f32[8,32], index: 2, kind: input, shape index: {}]
  %s3 = inlined_call_operand.vmem [shape: f32[32,64], index: 3, kind: input, shape index: {}]
  %s4 = inlined_call_operand.vmem [shape: f32[1,64], index: 4, kind: input, shape index: {}]
  %s5 = inlined_call_operand.vmem [shape: f32[32,16], index: 5, kind: input, shape index: {}]
  %s6 = inlined_call_operand.vmem [shape: f32[16,32], index: 6, kind: output, shape index: {0}]
  %s7 = inlined_call_operand.vmem [shape: f32[16,16], index: 7, kind: output, shape index: {1}]
  %8 = xla_tuple %s6, %s7
  %s9 = sld [smem:[#allocation0]]
  $region42: #{interaction_pp_block.3} parent=0
    _
  %s11 = ssub.s32 1, %s9
  %s12 = scalar_select 0, %s11, %s9
  // Predicated region
  $region2: #{interaction_pp_block.3} parent=0 // pred_check
    _
  $region3: #{interaction_pp_block.3} parent=0 // pred_check_branch
    %14 = sbr.rel (0) target = $region5
  $region4: #{interaction_pp_block.3} parent=0 // pred_region
    _
  $region5: #{interaction_pp_block.3} parent=0 // pred_fallthru
    _
  // Predicated region
  $region6: #{interaction_pp_block.3} parent=0 // pred_check
    _
  $region7: #{interaction_pp_block.3} parent=0 // pred_check_branch
    %16 = sbr.rel (0) target = $region9
  $region8: #{interaction_pp_block.3} parent=0 // pred_region
    _
  $region9: #{interaction_pp_block.3} parent=0 // pred_fallthru
    _
  // Predicated region
  $region10: #{interaction_pp_block.3} parent=0 // pred_check
    _
  $region11: #{interaction_pp_block.3} parent=0 // pred_check_branch
    %18 = sbr.rel (0) target = $region13
  $region12: #{interaction_pp_block.3} parent=0 // pred_region
    _
  $region13: #{interaction_pp_block.3} parent=0 // pred_fallthru
    _
  // Predicated region
  $region14: #{interaction_pp_block.3} parent=0 // pred_check
    _
  $region15: #{interaction_pp_block.3} parent=0 // pred_check_branch
    %20 = sbr.rel (0) target = $region17
  $region16: #{interaction_pp_block.3} parent=0 // pred_region
    _
  $region17: #{interaction_pp_block.3} parent=0 // pred_fallthru
    _
  // Predicated region
  $region18: #{interaction_pp_block.3} parent=0 // pred_check
    _
  $region19: #{interaction_pp_block.3} parent=0 // pred_check_branch
    %22 = sbr.rel (0) target = $region21
  $region20: #{interaction_pp_block.3} parent=0 // pred_region
    _
  $region21: #{interaction_pp_block.3} parent=0 // pred_fallthru
    _
  // Predicated region
  $region22: #{interaction_pp_block.3} parent=0 // pred_check
    _
  $region23: #{interaction_pp_block.3} parent=0 // pred_check_branch
    %24 = sbr.rel (0) target = $region25
  $region24: #{interaction_pp_block.3} parent=0 // pred_region
    _
  $region25: #{interaction_pp_block.3} parent=0 // pred_fallthru
    _
  %v25 = vld [vmem:[%s0] sm:$0xff]
  %v26 = vld [vmem:[%s0 + $0x8] sm:$0xff]
  %v27 = vld [vmem:[%s2] sm:$0xff]
  %vm28 = vcmask 64512
  %v30 = vsel %vm28, %v25, 0
  %v33 = vsel %vm28, %v26, 0
  %35 = vmatpush.msra.mxu0 0.0
  %36 = vmatpush.msra.mxu0 0.0
  %37 = vmatpush.msra.mxu0 0.0
  %38 = vmatpush.msra.mxu0 0.0
  %39 = vmatpush.msra.mxu0 0.0
  %40 = vmatpush.msra.mxu0 0.0
  %41 = vmatpush.msra.mxu0 0.0
  %42 = vmatpush.msra.mxu0 0.0
  %43 = vmatpush.msra.mxu0 0.0
  %44 = vmatpush.msra.mxu0 0.0
  %45 = vmatpush.msra.mxu0 0.0
  %46 = vmatpush.msra.mxu0 0.0
  %47 = vmatpush.msra.mxu0 0.0
  %48 = vmatpush.msra.mxu0 0.0
  %49 = vmatpush.msra.mxu0 0.0
  %50 = vmatpush.msra.mxu0 %v27
  %51 = vmatmul.f32.gmra.mxu0 %v30
  %v52 = vpop.f32.mrf.mxu0
  %v53 = vadd.f32 0.0, %v52
  %54 = vmatmul.f32.gmra.mxu0 %v33
  %v55 = vpop.f32.mrf.mxu0
  %v56 = vadd.f32 0.0, %v55
  %57 = vdwg.mxu0
  %v58 = vld [vmem:[%s1] sm:$0xff]
  %v59 = vld [vmem:[%s1 + $0x8] sm:$0xff]
  %v60 = vld [vmem:[%s3] sm:$0xff]
  %v61 = vld [vmem:[%s3 + $0x8] sm:$0xff]
  %v62 = vld [vmem:[%s3 + $0x10] sm:$0xff]
  %v63 = vld [vmem:[%s3 + $0x18] sm:$0xff]
  %v64 = vld [vmem:[%s4] sm:$0x1]
  %v66 = vperm.slane %v64, 0
  %vm68 = vcmask 261120
  %v70 = vsel %vm68, %v58, 0
  %v73 = vsel %vm68, %v59, 0
  %75 = vmatpush.msra.mxu0 0.0
  %76 = vmatpush.msra.mxu0 0.0
  %77 = vmatpush.msra.mxu0 0.0
  %78 = vmatpush.msra.mxu0 0.0
  %79 = vmatpush.msra.mxu0 0.0
  %80 = vmatpush.msra.mxu0 0.0
  %81 = vmatpush.msra.mxu0 0.0
  %82 = vmatpush.msra.mxu0 0.0
  %83 = vmatpush.msra.mxu0 0.0
  %84 = vmatpush.msra.mxu0 0.0
  %85 = vmatpush.msra.mxu0 0.0
  %86 = vmatpush.msra.mxu0 0.0
  %87 = vmatpush.msra.mxu0 %v63
  %88 = vmatpush.msra.mxu0 %v62
  %89 = vmatpush.msra.mxu0 %v61
  %90 = vmatpush.msra.mxu0 %v60
  %91 = vmatmul.f32.gmra.mxu0 %v70
  %v92 = vpop.f32.mrf.mxu0
  %v93 = vadd.f32 %v66, %v92
  %94 = vmatmul.f32.gmra.mxu0 %v73
  %v95 = vpop.f32.mrf.mxu0
  %v96 = vadd.f32 %v66, %v95
  %97 = vdwg.mxu0
  %v98 = vxor.u32 %v93, 2147483648
  %v99 = vxor.u32 %v96, 2147483648
  %v100 = vmul.f32 %v98, 1.442695
  %v101 = vpow.pop %v100
  %v102 = vmul.f32 %v99, 1.442695
  %v103 = vpow.pop %v102
  %v104 = vadd.f32 %v101, 1.0
  %v105 = vadd.f32 %v103, 1.0
  %v106 = vrcp.pop %v104
  %v107 = vmul.f32 %v104, %v106
  %v108 = vsub.f32 1.0, %v107
  %v109 = vmul.f32 %v106, %v108
  %v110 = vadd.f32 %v106, %v109
  %vm111 = vweird.f32 %v104
  %vm112 = vweird.f32 %v106
  %vm113 = vmor %vm111, %vm112
  %v114 = vsel %vm113, %v106, %v110
  %v115 = vand.u32 2147483647, %v104
  %vm116 = vcmp.eq.f32.partialorder %v115, 8.507059e+37
  %v117 = vand.u32 %v104, 2147483648
  %v118 = vor.u32 1.1754944e-38, %v117
  %v119 = vsel %vm116, %v118, %v114
  %v120 = vmul.f32 1.0, %v119
  %v121 = vrcp.pop %v105
  %v122 = vmul.f32 %v105, %v121
  %v123 = vsub.f32 1.0, %v122
  %v124 = vmul.f32 %v121, %v123
  %v125 = vadd.f32 %v121, %v124
  %vm126 = vweird.f32 %v105
  %vm127 = vweird.f32 %v121
  %vm128 = vmor %vm126, %vm127
  %v129 = vsel %vm128, %v121, %v125
  %v130 = vand.u32 2147483647, %v105
  %vm131 = vcmp.eq.f32.partialorder %v130, 8.507059e+37
  %v132 = vand.u32 %v105, 2147483648
  %v133 = vor.u32 1.1754944e-38, %v132
  %v134 = vsel %vm131, %v133, %v129
  %v135 = vmul.f32 1.0, %v134
  %v136 = vmul.f32 %v93, %v120
  %v137 = vmul.f32 %v96, %v135
  %140 = vrot.lane.b32.xlu0 %v53, 32
  %v141 = vpop.permute.xlu0 %140
  %142 = vrot.lane.b32.xlu0 %v56, 32
  %v143 = vpop.permute.xlu0 %142
  %v146 = vmul.f32 %v136, %v141
  %v147 = vmul.f32 %v137, %v143
  %v148 = vld [vmem:[%s5] sm:$0xff]
  %v149 = vld [vmem:[%s5 + $0x8] sm:$0xff]
  %v150 = vld [vmem:[%s5 + $0x10] sm:$0xff]
  %v151 = vld [vmem:[%s5 + $0x18] sm:$0xff]
  %154 = vrot.lane.b32.xlu0 %v146, 96
  %v155 = vpop.permute.xlu0 %154
  %156 = vrot.lane.b32.xlu0 %v147, 96
  %v157 = vpop.permute.xlu0 %156
  %v158 = vsel %vm68, %v155, 0
  %v160 = vsel %vm68, %v157, 0
  %162 = vmatpush.msra.mxu0 0.0
  %163 = vmatpush.msra.mxu0 0.0
  %164 = vmatpush.msra.mxu0 0.0
  %165 = vmatpush.msra.mxu0 0.0
  %166 = vmatpush.msra.mxu0 0.0
  %167 = vmatpush.msra.mxu0 0.0
  %168 = vmatpush.msra.mxu0 0.0
  %169 = vmatpush.msra.mxu0 0.0
  %170 = vmatpush.msra.mxu0 0.0
  %171 = vmatpush.msra.mxu0 0.0
  %172 = vmatpush.msra.mxu0 0.0
  %173 = vmatpush.msra.mxu0 0.0
  %174 = vmatpush.msra.mxu0 %v151
  %175 = vmatpush.msra.mxu0 %v150
  %176 = vmatpush.msra.mxu0 %v149
  %177 = vmatpush.msra.mxu0 %v148
  %178 = vmatmul.f32.gmra.mxu0 %v158
  %v179 = vpop.f32.mrf.mxu0
  %v180 = vadd.f32 0.0, %v179
  %181 = vmatmul.f32.gmra.mxu0 %v160
  %v182 = vpop.f32.mrf.mxu0
  %v183 = vadd.f32 0.0, %v182
  %184 = vdwg.mxu0
  %v185 = vxor.u32 %v180, 2147483648
  %v186 = vxor.u32 %v183, 2147483648
  %v187 = vmul.f32 %v185, 1.442695
  %v188 = vpow.pop %v187
  %v189 = vmul.f32 %v186, 1.442695
  %v190 = vpow.pop %v189
  %v191 = vadd.f32 %v188, 1.0
  %v192 = vadd.f32 %v190, 1.0
  %v193 = vrcp.pop %v191
  %v194 = vmul.f32 %v191, %v193
  %v195 = vsub.f32 1.0, %v194
  %v196 = vmul.f32 %v193, %v195
  %v197 = vadd.f32 %v193, %v196
  %vm198 = vweird.f32 %v191
  %vm199 = vweird.f32 %v193
  %vm200 = vmor %vm198, %vm199
  %v201 = vsel %vm200, %v193, %v197
  %v202 = vand.u32 2147483647, %v191
  %vm203 = vcmp.eq.f32.partialorder %v202, 8.507059e+37
  %v204 = vand.u32 %v191, 2147483648
  %v205 = vor.u32 1.1754944e-38, %v204
  %v206 = vsel %vm203, %v205, %v201
  %v207 = vmul.f32 1.0, %v206
  %v208 = vrcp.pop %v192
  %v209 = vmul.f32 %v192, %v208
  %v210 = vsub.f32 1.0, %v209
  %v211 = vmul.f32 %v208, %v210
  %v212 = vadd.f32 %v208, %v211
  %vm213 = vweird.f32 %v192
  %vm214 = vweird.f32 %v208
  %vm215 = vmor %vm213, %vm214
  %v216 = vsel %vm215, %v208, %v212
  %v217 = vand.u32 2147483647, %v192
  %vm218 = vcmp.eq.f32.partialorder %v217, 8.507059e+37
  %v219 = vand.u32 %v192, 2147483648
  %v220 = vor.u32 1.1754944e-38, %v219
  %v221 = vsel %vm218, %v220, %v216
  %v222 = vmul.f32 1.0, %v221
  %v223 = vmul.f32 %v180, %v207
  %v224 = vmul.f32 %v183, %v222
  %225 = vst.msk [vmem:[%s6] sm:$0xff] %vm68, %v136
  %226 = vst.msk [vmem:[%s6 + $0x8] sm:$0xff] %vm68, %v137
  %vm227 = vcmask 130048
  %228 = vst.msk [vmem:[%s7] sm:$0xff] %vm227, %v223
  %229 = vst.msk [vmem:[%s7 + $0x8] sm:$0xff] %vm227, %v224
  // Predicated region
  $region26: #{interaction_pp_block.3} parent=0 // pred_check
    _
  $region27: #{interaction_pp_block.3} parent=0 // pred_check_branch
    %231 = sbr.rel (0) target = $region29
  $region28: #{interaction_pp_block.3} parent=0 // pred_region
    _
  $region29: #{interaction_pp_block.3} parent=0 // pred_fallthru
    _
  // Predicated region
  $region30: #{interaction_pp_block.3} parent=0 // pred_check
    _
  $region31: #{interaction_pp_block.3} parent=0 // pred_check_branch
    %233 = sbr.rel (0) target = $region33
  $region32: #{interaction_pp_block.3} parent=0 // pred_region
    _
  $region33: #{interaction_pp_block.3} parent=0 // pred_fallthru
    _
  // Predicated region
  $region34: #{interaction_pp_block.3} parent=0 // pred_check
    _
  $region35: #{interaction_pp_block.3} parent=0 // pred_check_branch
    %235 = sbr.rel (0) target = $region37
  $region36: #{interaction_pp_block.3} parent=0 // pred_region
    _
  $region37: #{interaction_pp_block.3} parent=0 // pred_fallthru
    _
  // Predicated region
  $region38: #{interaction_pp_block.3} parent=0 // pred_check
    _
  $region39: #{interaction_pp_block.3} parent=0 // pred_check_branch
    %237 = sbr.rel (0) target = $region41
  $region40: #{interaction_pp_block.3} parent=0 // pred_region
    _
  $region41: #{interaction_pp_block.3} parent=0 // pred_fallthru
    _

// kernel: interaction_pp_block.5
$region0: #{interaction_pp_block.5}
  #allocation0 [shape = 'u32[]', space=smem, size = 0x4, offset = 0x4, fixed_abs, tag = 'smem constant byte address 0x4 - core index']
  #allocation1 [shape = 'u32[72,128]{1,0:T(1,128)}', space=vmem, size = 0x9000, scoped, tag = 'internal scratch']
  %s0 = inlined_call_operand.vmem [shape: f32[16,16], index: 0, kind: input, shape index: {}]
  %s1 = inlined_call_operand.vmem [shape: f32[16,32], index: 1, kind: input, shape index: {}]
  %s2 = inlined_call_operand.vmem [shape: f32[16,32], index: 2, kind: input, shape index: {}]
  %s3 = inlined_call_operand.hbm [shape: f32[16,32], index: 3, kind: input, shape index: {}]
  %s4 = inlined_call_operand.hbm [shape: f32[1,32,32], index: 4, kind: input, shape index: {}]
  %s5 = inlined_call_operand.hbm [shape: f32[1,1,32], index: 5, kind: input, shape index: {}]
  %s6 = inlined_call_operand.hbm [shape: f32[1,32,32], index: 6, kind: input, shape index: {}]
  %s7 = inlined_call_operand.hbm [shape: f32[1,1,32], index: 7, kind: input, shape index: {}]
  %s8 = inlined_call_operand.hbm [shape: f32[32,32], index: 8, kind: input, shape index: {}]
  %s9 = inlined_call_operand.hbm [shape: f32[1,32], index: 9, kind: input, shape index: {}]
  %s10 = inlined_call_operand.vmem [shape: f32[2,32,32], index: 10, kind: input, shape index: {}]
  %s11 = inlined_call_operand.vmem [shape: f32[2,1,32], index: 11, kind: input, shape index: {}]
  %s12 = inlined_call_operand.vmem [shape: f32[2,32,32], index: 12, kind: input, shape index: {}]
  %s13 = inlined_call_operand.hbm [shape: f32[2,1,32], index: 13, kind: input, shape index: {}]
  %s14 = inlined_call_operand.hbm [shape: f32[16,32], index: 14, kind: output, shape index: {}]
  %s15 = sld [smem:[#allocation0]]
  $region98: #{interaction_pp_block.5} parent=0
    _
  %s17 = ssub.s32 1, %s15
  %s18 = scalar_select 0, %s17, %s15
  $region1: #{interaction_pp_block.5} parent=0
    #allocation2 [shape = 'u8[8192]{0}', space=vmem, size = 0x2000, scoped, tag = 'input window, operand 3, single buffered']
    #allocation3 [shape = 's32[1]{0}', space=sflag, size = 0x4, scoped, tag = 'scoped memory for interaction_pp_block.5']
    #allocation4 [shape = 's32[1]{0}', space=sflag, size = 0x4, scoped, tag = 'scoped memory for interaction_pp_block.5']
    #allocation5 [shape = 'u8[16384]{0}', space=vmem, size = 0x4000, scoped, tag = 'input window, operand 4, single buffered']
    #allocation6 [shape = 's32[1]{0}', space=sflag, size = 0x4, scoped, tag = 'scoped memory for interaction_pp_block.5']
    #allocation7 [shape = 'u8[512]{0}', space=vmem, size = 0x400, scoped, tag = 'input window, operand 5, single buffered']
    #allocation8 [shape = 'u8[16384]{0}', space=vmem, size = 0x4000, scoped, tag = 'input window, operand 6, single buffered']
    #allocation9 [shape = 's32[1]{0}', space=sflag, size = 0x4, scoped, tag = 'scoped memory for interaction_pp_block.5']
    #allocation10 [shape = 'u8[512]{0}', space=vmem, size = 0x400, scoped, tag = 'input window, operand 7, single buffered']
    #allocation11 [shape = 'u8[16384]{0}', space=vmem, size = 0x4000, scoped, tag = 'input window, operand 8, single buffered']
    #allocation12 [shape = 's32[1]{0}', space=sflag, size = 0x4, scoped, tag = 'scoped memory for interaction_pp_block.5']
    #allocation13 [shape = 'u8[512]{0}', space=vmem, size = 0x400, scoped, tag = 'input window, operand 9, single buffered']
    #allocation14 [shape = 'u8[1024]{0}', space=vmem, size = 0x400, scoped, tag = 'input window, operand 13, single buffered']
    #allocation15 [shape = 's32[1]{0}', space=sflag, size = 0x4, scoped, tag = 'scoped memory for interaction_pp_block.5']
    #allocation16 [shape = 'u8[8192]{0}', space=vmem, size = 0x2000, scoped, tag = 'output window, operand 0, single buffered']
    %19 = vsyncpa [#allocation3], 0
    %20 = vsyncpa [#allocation6], 0
    %21 = vsyncpa [#allocation9], 0
    %22 = vsyncpa [#allocation12], 0
    %23 = vsyncpa [#allocation15], 0
    %24 = vsyncpa [#allocation4], 0
    // Predicated region
    $region2: #{interaction_pp_block.5} parent=1 // pred_check
      _
    $region3: #{interaction_pp_block.5} parent=1 // pred_check_branch
      %26 = sbr.rel (0) target = $region5
    $region4: #{interaction_pp_block.5} parent=1 // pred_region
      _
    $region5: #{interaction_pp_block.5} parent=1 // pred_fallthru
      _
    // Predicated region
    $region6: #{interaction_pp_block.5} parent=1 // pred_check
      _
    $region7: #{interaction_pp_block.5} parent=1 // pred_check_branch
      %28 = sbr.rel (0) target = $region9
    $region8: #{interaction_pp_block.5} parent=1 // pred_region
      _
    $region9: #{interaction_pp_block.5} parent=1 // pred_fallthru
      _
    // Predicated region
    $region10: #{interaction_pp_block.5} parent=1 // pred_check
      _
    $region11: #{interaction_pp_block.5} parent=1 // pred_check_branch
      %30 = sbr.rel (0) target = $region13
    $region12: #{interaction_pp_block.5} parent=1 // pred_region
      _
    $region13: #{interaction_pp_block.5} parent=1 // pred_fallthru
      _
    // Predicated region
    $region14: #{interaction_pp_block.5} parent=1 // pred_check
      _
    $region15: #{interaction_pp_block.5} parent=1 // pred_check_branch
      %32 = sbr.rel (0) target = $region17
    $region16: #{interaction_pp_block.5} parent=1 // pred_region
      %34 = vsyncadd [#allocation3], 0
      %s35 = sshll.u32 %s3, 4
      %s36 = int_to_ptr.hbm [resolvable:$true] %s35
      %s37 = sshll.u32 [#allocation2], 4
      %s38 = int_to_ptr.vmem [resolvable:$true] %s37
      %43 = dma.hbm_to_vmem [thread:$0]  %s36, 256, %s38, [#allocation3], 128, 128, 8
    $region17: #{interaction_pp_block.5} parent=1 // pred_fallthru
      _
    // Predicated region
    $region18: #{interaction_pp_block.5} parent=1 // pred_check
      _
    $region19: #{interaction_pp_block.5} parent=1 // pred_check_branch
      %45 = sbr.rel (0) target = $region21
    $region20: #{interaction_pp_block.5} parent=1 // pred_region
      %47 = vsyncadd [#allocation6], 0
      %s48 = sshll.u32 %s4, 4
      %s49 = int_to_ptr.hbm [resolvable:$true] %s48
      %s50 = sshll.u32 [#allocation5], 4
      %s51 = int_to_ptr.vmem [resolvable:$true] %s50
      %56 = dma.hbm_to_vmem [thread:$0]  %s49, 512, %s51, [#allocation6], 128, 128, 8
    $region21: #{interaction_pp_block.5} parent=1 // pred_fallthru
      _
    // Predicated region
    $region22: #{interaction_pp_block.5} parent=1 // pred_check
      _
    $region23: #{interaction_pp_block.5} parent=1 // pred_check_branch
      %58 = sbr.rel (0) target = $region25
    $region24: #{interaction_pp_block.5} parent=1 // pred_region
      %60 = vsyncadd [#allocation6], 0
      %s62 = sshll.u32 %s5, 4
      %s63 = int_to_ptr.hbm [resolvable:$true] %s62
      %s64 = sshll.u32 [#allocation7], 4
      %s65 = int_to_ptr.vmem [resolvable:$true] %s64
      %67 = dma.hbm_to_vmem [thread:$0]  %s63, 16, %s65, [#allocation6]
    $region25: #{interaction_pp_block.5} parent=1 // pred_fallthru
      _
    // Predicated region
    $region26: #{interaction_pp_block.5} parent=1 // pred_check
      _
    $region27: #{interaction_pp_block.5} parent=1 // pred_check_branch
      %69 = sbr.rel (0) target = $region29
    $region28: #{interaction_pp_block.5} parent=1 // pred_region
      %71 = vsyncadd [#allocation9], 0
      %s72 = sshll.u32 %s6, 4
      %s73 = int_to_ptr.hbm [resolvable:$true] %s72
      %s74 = sshll.u32 [#allocation8], 4
      %s75 = int_to_ptr.vmem [resolvable:$true] %s74
      %80 = dma.hbm_to_vmem [thread:$0]  %s73, 512, %s75, [#allocation9], 128, 128, 8
    $region29: #{interaction_pp_block.5} parent=1 // pred_fallthru
      _
    // Predicated region
    $region30: #{interaction_pp_block.5} parent=1 // pred_check
      _
    $region31: #{interaction_pp_block.5} parent=1 // pred_check_branch
      %82 = sbr.rel (0) target = $region33
    $region32: #{interaction_pp_block.5} parent=1 // pred_region
      %84 = vsyncadd [#allocation9], 0
      %s86 = sshll.u32 %s7, 4
      %s87 = int_to_ptr.hbm [resolvable:$true] %s86
      %s88 = sshll.u32 [#allocation10], 4
      %s89 = int_to_ptr.vmem [resolvable:$true] %s88
      %91 = dma.hbm_to_vmem [thread:$0]  %s87, 16, %s89, [#allocation9]
    $region33: #{interaction_pp_block.5} parent=1 // pred_fallthru
      _
    // Predicated region
    $region34: #{interaction_pp_block.5} parent=1 // pred_check
      _
    $region35: #{interaction_pp_block.5} parent=1 // pred_check_branch
      %93 = sbr.rel (0) target = $region37
    $region36: #{interaction_pp_block.5} parent=1 // pred_region
      %95 = vsyncadd [#allocation12], 0
      %s96 = sshll.u32 %s8, 4
      %s97 = int_to_ptr.hbm [resolvable:$true] %s96
      %s98 = sshll.u32 [#allocation11], 4
      %s99 = int_to_ptr.vmem [resolvable:$true] %s98
      %104 = dma.hbm_to_vmem [thread:$0]  %s97, 512, %s99, [#allocation12], 128, 128, 8
    $region37: #{interaction_pp_block.5} parent=1 // pred_fallthru
      _
    // Predicated region
    $region38: #{interaction_pp_block.5} parent=1 // pred_check
      _
    $region39: #{interaction_pp_block.5} parent=1 // pred_check_branch
      %106 = sbr.rel (0) target = $region41
    $region40: #{interaction_pp_block.5} parent=1 // pred_region
      %108 = vsyncadd [#allocation12], 0
      %s110 = sshll.u32 %s9, 4
      %s111 = int_to_ptr.hbm [resolvable:$true] %s110
      %s112 = sshll.u32 [#allocation13], 4
      %s113 = int_to_ptr.vmem [resolvable:$true] %s112
      %115 = dma.hbm_to_vmem [thread:$0]  %s111, 16, %s113, [#allocation12]
    $region41: #{interaction_pp_block.5} parent=1 // pred_fallthru
      _
    // Predicated region
    $region42: #{interaction_pp_block.5} parent=1 // pred_check
      _
    $region43: #{interaction_pp_block.5} parent=1 // pred_check_branch
      %117 = sbr.rel (0) target = $region45
    $region44: #{interaction_pp_block.5} parent=1 // pred_region
      _
    $region45: #{interaction_pp_block.5} parent=1 // pred_fallthru
      _
    // Predicated region
    $region46: #{interaction_pp_block.5} parent=1 // pred_check
      _
    $region47: #{interaction_pp_block.5} parent=1 // pred_check_branch
      %119 = sbr.rel (0) target = $region49
    $region48: #{interaction_pp_block.5} parent=1 // pred_region
      _
    $region49: #{interaction_pp_block.5} parent=1 // pred_fallthru
      _
    // Predicated region
    $region50: #{interaction_pp_block.5} parent=1 // pred_check
      _
    $region51: #{interaction_pp_block.5} parent=1 // pred_check_branch
      %121 = sbr.rel (0) target = $region53
    $region52: #{interaction_pp_block.5} parent=1 // pred_region
      _
    $region53: #{interaction_pp_block.5} parent=1 // pred_fallthru
      _
    // Predicated region
    $region54: #{interaction_pp_block.5} parent=1 // pred_check
      _
    $region55: #{interaction_pp_block.5} parent=1 // pred_check_branch
      %123 = sbr.rel (0) target = $region57
    $region56: #{interaction_pp_block.5} parent=1 // pred_region
      %125 = vsyncadd [#allocation15], 0
      %s126 = sshll.u32 %s13, 4
      %s127 = int_to_ptr.hbm [resolvable:$true] %s126
      %s128 = sshll.u32 [#allocation14], 4
      %s129 = int_to_ptr.vmem [resolvable:$true] %s128
      %134 = dma.hbm_to_vmem [thread:$0]  %s127, 32, %s129, [#allocation15], 16, 16, 1
    $region57: #{interaction_pp_block.5} parent=1 // pred_fallthru
      _
    // Predicated region
    $region58: #{interaction_pp_block.5} parent=1 // pred_check
      _
    $region59: #{interaction_pp_block.5} parent=1 // pred_check_branch
      %136 = sbr.rel (0) target = $region61
    $region60: #{interaction_pp_block.5} parent=1 // pred_region
      %138 = dma.done [#allocation3], 256
    $region61: #{interaction_pp_block.5} parent=1 // pred_fallthru
      _
    // Predicated region
    $region62: #{interaction_pp_block.5} parent=1 // pred_check
      _
    $region63: #{interaction_pp_block.5} parent=1 // pred_check_branch
      %140 = sbr.rel (0) target = $region65
    $region64: #{interaction_pp_block.5} parent=1 // pred_region
      %142 = dma.done [#allocation6], 512
    $region65: #{interaction_pp_block.5} parent=1 // pred_fallthru
      _
    // Predicated region
    $region66: #{interaction_pp_block.5} parent=1 // pred_check
      _
    $region67: #{interaction_pp_block.5} parent=1 // pred_check_branch
      %144 = sbr.rel (0) target = $region69
    $region68: #{interaction_pp_block.5} parent=1 // pred_region
      %146 = dma.done [#allocation6], 16
    $region69: #{interaction_pp_block.5} parent=1 // pred_fallthru
      _
    // Predicated region
    $region70: #{interaction_pp_block.5} parent=1 // pred_check
      _
    $region71: #{interaction_pp_block.5} parent=1 // pred_check_branch
      %148 = sbr.rel (0) target = $region73
    $region72: #{interaction_pp_block.5} parent=1 // pred_region
      %150 = dma.done [#allocation9], 512
    $region73: #{interaction_pp_block.5} parent=1 // pred_fallthru
      _
    // Predicated region
    $region74: #{interaction_pp_block.5} parent=1 // pred_check
      _
    $region75: #{interaction_pp_block.5} parent=1 // pred_check_branch
      %152 = sbr.rel (0) target = $region77
    $region76: #{interaction_pp_block.5} parent=1 // pred_region
      %154 = dma.done [#allocation9], 16
    $region77: #{interaction_pp_block.5} parent=1 // pred_fallthru
      _
    // Predicated region
    $region78: #{interaction_pp_block.5} parent=1 // pred_check
      _
    $region79: #{interaction_pp_block.5} parent=1 // pred_check_branch
      %156 = sbr.rel (0) target = $region81
    $region80: #{interaction_pp_block.5} parent=1 // pred_region
      %158 = dma.done [#allocation12], 512
    $region81: #{interaction_pp_block.5} parent=1 // pred_fallthru
      _
    // Predicated region
    $region82: #{interaction_pp_block.5} parent=1 // pred_check
      _
    $region83: #{interaction_pp_block.5} parent=1 // pred_check_branch
      %160 = sbr.rel (0) target = $region85
    $region84: #{interaction_pp_block.5} parent=1 // pred_region
      %162 = dma.done [#allocation12], 16
    $region85: #{interaction_pp_block.5} parent=1 // pred_fallthru
      _
    // Predicated region
    $region86: #{interaction_pp_block.5} parent=1 // pred_check
      _
    $region87: #{interaction_pp_block.5} parent=1 // pred_check_branch
      %164 = sbr.rel (0) target = $region89
    $region88: #{interaction_pp_block.5} parent=1 // pred_region
      %166 = dma.done [#allocation15], 32
    $region89: #{interaction_pp_block.5} parent=1 // pred_fallthru
      _
    %v167 = vld [vmem:[%s0] sm:$0xff]
    %v168 = vld [vmem:[%s0 + $0x8] sm:$0xff]
    %v169 = vld [vmem:[#allocation2] sm:$0xff]
    %v170 = vld [vmem:[#allocation2 + $0x8] sm:$0xff]
    %vm171 = vcmask 130048
    %v173 = vsel %vm171, %v167, 0
    %v176 = vsel %vm171, %v168, 0
    %178 = vmatpush.msra.mxu0 0.0
    %179 = vmatpush.msra.mxu0 0.0
    %180 = vmatpush.msra.mxu0 0.0
    %181 = vmatpush.msra.mxu0 0.0
    %182 = vmatpush.msra.mxu0 0.0
    %183 = vmatpush.msra.mxu0 0.0
    %184 = vmatpush.msra.mxu0 0.0
    %185 = vmatpush.msra.mxu0 0.0
    %186 = vmatpush.msra.mxu0 0.0
    %187 = vmatpush.msra.mxu0 0.0
    %188 = vmatpush.msra.mxu0 0.0
    %189 = vmatpush.msra.mxu0 0.0
    %190 = vmatpush.msra.mxu0 0.0
    %191 = vmatpush.msra.mxu0 0.0
    %192 = vmatpush.msra.mxu0 %v170
    %193 = vmatpush.msra.mxu0 %v169
    %194 = vmatmul.f32.gmra.mxu0 %v173
    %v195 = vpop.f32.mrf.mxu0
    %v196 = vadd.f32 0.0, %v195
    %197 = vmatmul.f32.gmra.mxu0 %v176
    %v198 = vpop.f32.mrf.mxu0
    %v199 = vadd.f32 0.0, %v198
    %200 = vdwg.mxu0
    %v201 = vxor.u32 %v196, 2147483648
    %v202 = vxor.u32 %v199, 2147483648
    %v203 = vmul.f32 %v201, 1.442695
    %v204 = vpow.pop %v203
    %v205 = vmul.f32 %v202, 1.442695
    %v206 = vpow.pop %v205
    %v207 = vadd.f32 %v204, 1.0
    %v208 = vadd.f32 %v206, 1.0
    %v209 = vrcp.pop %v207
    %v210 = vmul.f32 %v207, %v209
    %v211 = vsub.f32 1.0, %v210
    %v212 = vmul.f32 %v209, %v211
    %v213 = vadd.f32 %v209, %v212
    %vm214 = vweird.f32 %v207
    %vm215 = vweird.f32 %v209
    %vm216 = vmor %vm214, %vm215
    %v217 = vsel %vm216, %v209, %v213
    %v218 = vand.u32 2147483647, %v207
    %vm219 = vcmp.eq.f32.partialorder %v218, 8.507059e+37
    %v220 = vand.u32 %v207, 2147483648
    %v221 = vor.u32 1.1754944e-38, %v220
    %v222 = vsel %vm219, %v221, %v217
    %v223 = vmul.f32 1.0, %v222
    %v224 = vrcp.pop %v208
    %v225 = vmul.f32 %v208, %v224
    %v226 = vsub.f32 1.0, %v225
    %v227 = vmul.f32 %v224, %v226
    %v228 = vadd.f32 %v224, %v227
    %vm229 = vweird.f32 %v208
    %vm230 = vweird.f32 %v224
    %vm231 = vmor %vm229, %vm230
    %v232 = vsel %vm231, %v224, %v228
    %v233 = vand.u32 2147483647, %v208
    %vm234 = vcmp.eq.f32.partialorder %v233, 8.507059e+37
    %v235 = vand.u32 %v208, 2147483648
    %v236 = vor.u32 1.1754944e-38, %v235
    %v237 = vsel %vm234, %v236, %v232
    %v238 = vmul.f32 1.0, %v237
    %v239 = vmul.f32 %v196, %v223
    %v240 = vmul.f32 %v199, %v238
    %v241 = vld [vmem:[%s1] sm:$0xff]
    %v242 = vld [vmem:[%s1 + $0x8] sm:$0xff]
    %v243 = vadd.f32 %v239, %v241
    %v244 = vadd.f32 %v240, %v242
    %v245 = vld [vmem:[#allocation5] sm:$0xff]
    %v246 = vld [vmem:[#allocation5 + $0x8] sm:$0xff]
    %v247 = vld [vmem:[#allocation5 + $0x10] sm:$0xff]
    %v248 = vld [vmem:[#allocation5 + $0x18] sm:$0xff]
    %v249 = vld [vmem:[#allocation7] sm:$0x1]
    %v251 = vperm.slane %v249, 0
    %vm253 = vcmask 261120
    %v255 = vsel %vm253, %v243, 0
    %v258 = vsel %vm253, %v244, 0
    %260 = vmatpush.msra.mxu0 0.0
    %261 = vmatpush.msra.mxu0 0.0
    %262 = vmatpush.msra.mxu0 0.0
    %263 = vmatpush.msra.mxu0 0.0
    %264 = vmatpush.msra.mxu0 0.0
    %265 = vmatpush.msra.mxu0 0.0
    %266 = vmatpush.msra.mxu0 0.0
    %267 = vmatpush.msra.mxu0 0.0
    %268 = vmatpush.msra.mxu0 0.0
    %269 = vmatpush.msra.mxu0 0.0
    %270 = vmatpush.msra.mxu0 0.0
    %271 = vmatpush.msra.mxu0 0.0
    %272 = vmatpush.msra.mxu0 %v248
    %273 = vmatpush.msra.mxu0 %v247
    %274 = vmatpush.msra.mxu0 %v246
    %275 = vmatpush.msra.mxu0 %v245
    %276 = vmatmul.f32.gmra.mxu0 %v255
    %v277 = vpop.f32.mrf.mxu0
    %v278 = vadd.f32 %v251, %v277
    %279 = vmatmul.f32.gmra.mxu0 %v258
    %v280 = vpop.f32.mrf.mxu0
    %v281 = vadd.f32 %v251, %v280
    %282 = vdwg.mxu0
    %v283 = vxor.u32 %v278, 2147483648
    %v284 = vxor.u32 %v281, 2147483648
    %v285 = vmul.f32 %v283, 1.442695
    %v286 = vpow.pop %v285
    %v287 = vmul.f32 %v284, 1.442695
    %v288 = vpow.pop %v287
    %v289 = vadd.f32 %v286, 1.0
    %v290 = vadd.f32 %v288, 1.0
    %v291 = vrcp.pop %v289
    %v292 = vmul.f32 %v289, %v291
    %v293 = vsub.f32 1.0, %v292
    %v294 = vmul.f32 %v291, %v293
    %v295 = vadd.f32 %v291, %v294
    %vm296 = vweird.f32 %v289
    %vm297 = vweird.f32 %v291
    %vm298 = vmor %vm296, %vm297
    %v299 = vsel %vm298, %v291, %v295
    %v300 = vand.u32 2147483647, %v289
    %vm301 = vcmp.eq.f32.partialorder %v300, 8.507059e+37
    %v302 = vand.u32 %v289, 2147483648
    %v303 = vor.u32 1.1754944e-38, %v302
    %v304 = vsel %vm301, %v303, %v299
    %v305 = vmul.f32 1.0, %v304
    %v306 = vrcp.pop %v290
    %v307 = vmul.f32 %v290, %v306
    %v308 = vsub.f32 1.0, %v307
    %v309 = vmul.f32 %v306, %v308
    %v310 = vadd.f32 %v306, %v309
    %vm311 = vweird.f32 %v290
    %vm312 = vweird.f32 %v306
    %vm313 = vmor %vm311, %vm312
    %v314 = vsel %vm313, %v306, %v310
    %v315 = vand.u32 2147483647, %v290
    %vm316 = vcmp.eq.f32.partialorder %v315, 8.507059e+37
    %v317 = vand.u32 %v290, 2147483648
    %v318 = vor.u32 1.1754944e-38, %v317
    %v319 = vsel %vm316, %v318, %v314
    %v320 = vmul.f32 1.0, %v319
    %v321 = vmul.f32 %v278, %v305
    %v322 = vmul.f32 %v281, %v320
    %v323 = vld [vmem:[#allocation8] sm:$0xff]
    %v324 = vld [vmem:[#allocation8 + $0x8] sm:$0xff]
    %v325 = vld [vmem:[#allocation8 + $0x10] sm:$0xff]
    %v326 = vld [vmem:[#allocation8 + $0x18] sm:$0xff]
    %v327 = vld [vmem:[#allocation10] sm:$0x1]
    %v329 = vperm.slane %v327, 0
    %v332 = vsel %vm253, %v321, 0
    %v335 = vsel %vm253, %v322, 0
    %337 = vmatpush.msra.mxu0 0.0
    %338 = vmatpush.msra.mxu0 0.0
    %339 = vmatpush.msra.mxu0 0.0
    %340 = vmatpush.msra.mxu0 0.0
    %341 = vmatpush.msra.mxu0 0.0
    %342 = vmatpush.msra.mxu0 0.0
    %343 = vmatpush.msra.mxu0 0.0
    %344 = vmatpush.msra.mxu0 0.0
    %345 = vmatpush.msra.mxu0 0.0
    %346 = vmatpush.msra.mxu0 0.0
    %347 = vmatpush.msra.mxu0 0.0
    %348 = vmatpush.msra.mxu0 0.0
    %349 = vmatpush.msra.mxu0 %v326
    %350 = vmatpush.msra.mxu0 %v325
    %351 = vmatpush.msra.mxu0 %v324
    %352 = vmatpush.msra.mxu0 %v323
    %353 = vmatmul.f32.gmra.mxu0 %v332
    %v354 = vpop.f32.mrf.mxu0
    %v355 = vadd.f32 %v329, %v354
    %356 = vmatmul.f32.gmra.mxu0 %v335
    %v357 = vpop.f32.mrf.mxu0
    %v358 = vadd.f32 %v329, %v357
    %359 = vdwg.mxu0
    %v360 = vxor.u32 %v355, 2147483648
    %v361 = vxor.u32 %v358, 2147483648
    %v362 = vmul.f32 %v360, 1.442695
    %v363 = vpow.pop %v362
    %v364 = vmul.f32 %v361, 1.442695
    %v365 = vpow.pop %v364
    %v366 = vadd.f32 %v363, 1.0
    %v367 = vadd.f32 %v365, 1.0
    %v368 = vrcp.pop %v366
    %v369 = vmul.f32 %v366, %v368
    %v370 = vsub.f32 1.0, %v369
    %v371 = vmul.f32 %v368, %v370
    %v372 = vadd.f32 %v368, %v371
    %vm373 = vweird.f32 %v366
    %vm374 = vweird.f32 %v368
    %vm375 = vmor %vm373, %vm374
    %v376 = vsel %vm375, %v368, %v372
    %v377 = vand.u32 2147483647, %v366
    %vm378 = vcmp.eq.f32.partialorder %v377, 8.507059e+37
    %v379 = vand.u32 %v366, 2147483648
    %v380 = vor.u32 1.1754944e-38, %v379
    %v381 = vsel %vm378, %v380, %v376
    %v382 = vmul.f32 1.0, %v381
    %v383 = vrcp.pop %v367
    %v384 = vmul.f32 %v367, %v383
    %v385 = vsub.f32 1.0, %v384
    %v386 = vmul.f32 %v383, %v385
    %v387 = vadd.f32 %v383, %v386
    %vm388 = vweird.f32 %v367
    %vm389 = vweird.f32 %v383
    %vm390 = vmor %vm388, %vm389
    %v391 = vsel %vm390, %v383, %v387
    %v392 = vand.u32 2147483647, %v367
    %vm393 = vcmp.eq.f32.partialorder %v392, 8.507059e+37
    %v394 = vand.u32 %v367, 2147483648
    %v395 = vor.u32 1.1754944e-38, %v394
    %v396 = vsel %vm393, %v395, %v391
    %v397 = vmul.f32 1.0, %v396
    %v398 = vmul.f32 %v355, %v382
    %v399 = vmul.f32 %v358, %v397
    %v400 = vadd.f32 %v243, %v398
    %v401 = vadd.f32 %v244, %v399
    %v402 = vld [vmem:[#allocation11] sm:$0xff]
    %v403 = vld [vmem:[#allocation11 + $0x8] sm:$0xff]
    %v404 = vld [vmem:[#allocation11 + $0x10] sm:$0xff]
    %v405 = vld [vmem:[#allocation11 + $0x18] sm:$0xff]
    %v406 = vld [vmem:[#allocation13] sm:$0x1]
    %v408 = vperm.slane %v406, 0
    %v411 = vsel %vm253, %v400, 0
    %v414 = vsel %vm253, %v401, 0
    %416 = vmatpush.msra.mxu0 0.0
    %417 = vmatpush.msra.mxu0 0.0
    %418 = vmatpush.msra.mxu0 0.0
    %419 = vmatpush.msra.mxu0 0.0
    %420 = vmatpush.msra.mxu0 0.0
    %421 = vmatpush.msra.mxu0 0.0
    %422 = vmatpush.msra.mxu0 0.0
    %423 = vmatpush.msra.mxu0 0.0
    %424 = vmatpush.msra.mxu0 0.0
    %425 = vmatpush.msra.mxu0 0.0
    %426 = vmatpush.msra.mxu0 0.0
    %427 = vmatpush.msra.mxu0 0.0
    %428 = vmatpush.msra.mxu0 %v405
    %429 = vmatpush.msra.mxu0 %v404
    %430 = vmatpush.msra.mxu0 %v403
    %431 = vmatpush.msra.mxu0 %v402
    %432 = vmatmul.f32.gmra.mxu0 %v411
    %v433 = vpop.f32.mrf.mxu0
    %v434 = vadd.f32 %v408, %v433
    %435 = vmatmul.f32.gmra.mxu0 %v414
    %v436 = vpop.f32.mrf.mxu0
    %v437 = vadd.f32 %v408, %v436
    %438 = vdwg.mxu0
    %v439 = vxor.u32 %v434, 2147483648
    %v440 = vxor.u32 %v437, 2147483648
    %v441 = vmul.f32 %v439, 1.442695
    %v442 = vpow.pop %v441
    %v443 = vmul.f32 %v440, 1.442695
    %v444 = vpow.pop %v443
    %v445 = vadd.f32 %v442, 1.0
    %v446 = vadd.f32 %v444, 1.0
    %v447 = vrcp.pop %v445
    %v448 = vmul.f32 %v445, %v447
    %v449 = vsub.f32 1.0, %v448
    %v450 = vmul.f32 %v447, %v449
    %v451 = vadd.f32 %v447, %v450
    %vm452 = vweird.f32 %v445
    %vm453 = vweird.f32 %v447
    %vm454 = vmor %vm452, %vm453
    %v455 = vsel %vm454, %v447, %v451
    %v456 = vand.u32 2147483647, %v445
    %vm457 = vcmp.eq.f32.partialorder %v456, 8.507059e+37
    %v458 = vand.u32 %v445, 2147483648
    %v459 = vor.u32 1.1754944e-38, %v458
    %v460 = vsel %vm457, %v459, %v455
    %v461 = vmul.f32 1.0, %v460
    %v462 = vrcp.pop %v446
    %v463 = vmul.f32 %v446, %v462
    %v464 = vsub.f32 1.0, %v463
    %v465 = vmul.f32 %v462, %v464
    %v466 = vadd.f32 %v462, %v465
    %vm467 = vweird.f32 %v446
    %vm468 = vweird.f32 %v462
    %vm469 = vmor %vm467, %vm468
    %v470 = vsel %vm469, %v462, %v466
    %v471 = vand.u32 2147483647, %v446
    %vm472 = vcmp.eq.f32.partialorder %v471, 8.507059e+37
    %v473 = vand.u32 %v446, 2147483648
    %v474 = vor.u32 1.1754944e-38, %v473
    %v475 = vsel %vm472, %v474, %v470
    %v476 = vmul.f32 1.0, %v475
    %v477 = vmul.f32 %v434, %v461
    %v478 = vmul.f32 %v437, %v476
    %v479 = vld [vmem:[%s2] sm:$0xff]
    %v480 = vld [vmem:[%s2 + $0x8] sm:$0xff]
    %v481 = vadd.f32 %v479, %v477
    %v482 = vadd.f32 %v480, %v478
    %v483 = vld [vmem:[%s10] sm:$0xff]
    %v484 = vld [vmem:[%s10 + $0x8] sm:$0xff]
    %v485 = vld [vmem:[%s10 + $0x10] sm:$0xff]
    %v486 = vld [vmem:[%s10 + $0x18] sm:$0xff]
    %v487 = vld [vmem:[%s11] sm:$0x1]
    %v489 = vperm.slane %v487, 0
    %v492 = vsel %vm253, %v481, 0
    %v495 = vsel %vm253, %v482, 0
    %497 = vmatpush.msra.mxu0 0.0
    %498 = vmatpush.msra.mxu0 0.0
    %499 = vmatpush.msra.mxu0 0.0
    %500 = vmatpush.msra.mxu0 0.0
    %501 = vmatpush.msra.mxu0 0.0
    %502 = vmatpush.msra.mxu0 0.0
    %503 = vmatpush.msra.mxu0 0.0
    %504 = vmatpush.msra.mxu0 0.0
    %505 = vmatpush.msra.mxu0 0.0
    %506 = vmatpush.msra.mxu0 0.0
    %507 = vmatpush.msra.mxu0 0.0
    %508 = vmatpush.msra.mxu0 0.0
    %509 = vmatpush.msra.mxu0 %v486
    %510 = vmatpush.msra.mxu0 %v485
    %511 = vmatpush.msra.mxu0 %v484
    %512 = vmatpush.msra.mxu0 %v483
    %513 = vmatmul.f32.gmra.mxu0 %v492
    %v514 = vpop.f32.mrf.mxu0
    %v515 = vadd.f32 %v489, %v514
    %516 = vmatmul.f32.gmra.mxu0 %v495
    %v517 = vpop.f32.mrf.mxu0
    %v518 = vadd.f32 %v489, %v517
    %519 = vdwg.mxu0
    %v520 = vxor.u32 %v515, 2147483648
    %v521 = vxor.u32 %v518, 2147483648
    %v522 = vmul.f32 %v520, 1.442695
    %v523 = vpow.pop %v522
    %v524 = vmul.f32 %v521, 1.442695
    %v525 = vpow.pop %v524
    %v526 = vadd.f32 %v523, 1.0
    %v527 = vadd.f32 %v525, 1.0
    %v528 = vrcp.pop %v526
    %v529 = vmul.f32 %v526, %v528
    %v530 = vsub.f32 1.0, %v529
    %v531 = vmul.f32 %v528, %v530
    %v532 = vadd.f32 %v528, %v531
    %vm533 = vweird.f32 %v526
    %vm534 = vweird.f32 %v528
    %vm535 = vmor %vm533, %vm534
    %v536 = vsel %vm535, %v528, %v532
    %v537 = vand.u32 2147483647, %v526
    %vm538 = vcmp.eq.f32.partialorder %v537, 8.507059e+37
    %v539 = vand.u32 %v526, 2147483648
    %v540 = vor.u32 1.1754944e-38, %v539
    %v541 = vsel %vm538, %v540, %v536
    %v542 = vmul.f32 1.0, %v541
    %v543 = vrcp.pop %v527
    %v544 = vmul.f32 %v527, %v543
    %v545 = vsub.f32 1.0, %v544
    %v546 = vmul.f32 %v543, %v545
    %v547 = vadd.f32 %v543, %v546
    %vm548 = vweird.f32 %v527
    %vm549 = vweird.f32 %v543
    %vm550 = vmor %vm548, %vm549
    %v551 = vsel %vm550, %v543, %v547
    %v552 = vand.u32 2147483647, %v527
    %vm553 = vcmp.eq.f32.partialorder %v552, 8.507059e+37
    %v554 = vand.u32 %v527, 2147483648
    %v555 = vor.u32 1.1754944e-38, %v554
    %v556 = vsel %vm553, %v555, %v551
    %v557 = vmul.f32 1.0, %v556
    %v558 = vmul.f32 %v515, %v542
    %v559 = vmul.f32 %v518, %v557
    %v560 = vld [vmem:[%s12] sm:$0xff]
    %v561 = vld [vmem:[%s12 + $0x8] sm:$0xff]
    %v562 = vld [vmem:[%s12 + $0x10] sm:$0xff]
    %v563 = vld [vmem:[%s12 + $0x18] sm:$0xff]
    %v564 = vld [vmem:[#allocation14] sm:$0x1]
    %v566 = vperm.slane %v564, 0
    %v569 = vsel %vm253, %v558, 0
    %v572 = vsel %vm253, %v559, 0
    %574 = vmatpush.msra.mxu0 0.0
    %575 = vmatpush.msra.mxu0 0.0
    %576 = vmatpush.msra.mxu0 0.0
    %577 = vmatpush.msra.mxu0 0.0
    %578 = vmatpush.msra.mxu0 0.0
    %579 = vmatpush.msra.mxu0 0.0
    %580 = vmatpush.msra.mxu0 0.0
    %581 = vmatpush.msra.mxu0 0.0
    %582 = vmatpush.msra.mxu0 0.0
    %583 = vmatpush.msra.mxu0 0.0
    %584 = vmatpush.msra.mxu0 0.0
    %585 = vmatpush.msra.mxu0 0.0
    %586 = vmatpush.msra.mxu0 %v563
    %587 = vmatpush.msra.mxu0 %v562
    %588 = vmatpush.msra.mxu0 %v561
    %589 = vmatpush.msra.mxu0 %v560
    %590 = vmatmul.f32.gmra.mxu0 %v569
    %v591 = vpop.f32.mrf.mxu0
    %v592 = vadd.f32 %v566, %v591
    %593 = vmatmul.f32.gmra.mxu0 %v572
    %v594 = vpop.f32.mrf.mxu0
    %v595 = vadd.f32 %v566, %v594
    %596 = vdwg.mxu0
    %v597 = vxor.u32 %v592, 2147483648
    %v598 = vxor.u32 %v595, 2147483648
    %v599 = vmul.f32 %v597, 1.442695
    %v600 = vpow.pop %v599
    %v601 = vmul.f32 %v598, 1.442695
    %v602 = vpow.pop %v601
    %v603 = vadd.f32 %v600, 1.0
    %v604 = vadd.f32 %v602, 1.0
    %v605 = vrcp.pop %v603
    %v606 = vmul.f32 %v603, %v605
    %v607 = vsub.f32 1.0, %v606
    %v608 = vmul.f32 %v605, %v607
    %v609 = vadd.f32 %v605, %v608
    %vm610 = vweird.f32 %v603
    %vm611 = vweird.f32 %v605
    %vm612 = vmor %vm610, %vm611
    %v613 = vsel %vm612, %v605, %v609
    %v614 = vand.u32 2147483647, %v603
    %vm615 = vcmp.eq.f32.partialorder %v614, 8.507059e+37
    %v616 = vand.u32 %v603, 2147483648
    %v617 = vor.u32 1.1754944e-38, %v616
    %v618 = vsel %vm615, %v617, %v613
    %v619 = vmul.f32 1.0, %v618
    %v620 = vrcp.pop %v604
    %v621 = vmul.f32 %v604, %v620
    %v622 = vsub.f32 1.0, %v621
    %v623 = vmul.f32 %v620, %v622
    %v624 = vadd.f32 %v620, %v623
    %vm625 = vweird.f32 %v604
    %vm626 = vweird.f32 %v620
    %vm627 = vmor %vm625, %vm626
    %v628 = vsel %vm627, %v620, %v624
    %v629 = vand.u32 2147483647, %v604
    %vm630 = vcmp.eq.f32.partialorder %v629, 8.507059e+37
    %v631 = vand.u32 %v604, 2147483648
    %v632 = vor.u32 1.1754944e-38, %v631
    %v633 = vsel %vm630, %v632, %v628
    %v634 = vmul.f32 1.0, %v633
    %v635 = vmul.f32 %v592, %v619
    %v636 = vmul.f32 %v595, %v634
    %v637 = vadd.f32 %v481, %v635
    %v638 = vadd.f32 %v482, %v636
    %s639 = scalar_lea.vmem %s10, 32
    %v640 = vld [vmem:[%s639] sm:$0xff]
    %v641 = vld [vmem:[%s639 + $0x8] sm:$0xff]
    %v642 = vld [vmem:[%s639 + $0x10] sm:$0xff]
    %v643 = vld [vmem:[%s639 + $0x18] sm:$0xff]
    %s644 = scalar_lea.vmem %s11, 1
    %v645 = vld [vmem:[%s644] sm:$0x1]
    %v647 = vperm.slane %v645, 0
    %v650 = vsel %vm253, %v637, 0
    %v653 = vsel %vm253, %v638, 0
    %655 = vmatpush.msra.mxu0 0.0
    %656 = vmatpush.msra.mxu0 0.0
    %657 = vmatpush.msra.mxu0 0.0
    %658 = vmatpush.msra.mxu0 0.0
    %659 = vmatpush.msra.mxu0 0.0
    %660 = vmatpush.msra.mxu0 0.0
    %661 = vmatpush.msra.mxu0 0.0
    %662 = vmatpush.msra.mxu0 0.0
    %663 = vmatpush.msra.mxu0 0.0
    %664 = vmatpush.msra.mxu0 0.0
    %665 = vmatpush.msra.mxu0 0.0
    %666 = vmatpush.msra.mxu0 0.0
    %667 = vmatpush.msra.mxu0 %v643
    %668 = vmatpush.msra.mxu0 %v642
    %669 = vmatpush.msra.mxu0 %v641
    %670 = vmatpush.msra.mxu0 %v640
    %671 = vmatmul.f32.gmra.mxu0 %v650
    %v672 = vpop.f32.mrf.mxu0
    %v673 = vadd.f32 %v647, %v672
    %674 = vmatmul.f32.gmra.mxu0 %v653
    %v675 = vpop.f32.mrf.mxu0
    %v676 = vadd.f32 %v647, %v675
    %677 = vdwg.mxu0
    %v678 = vxor.u32 %v673, 2147483648
    %v679 = vxor.u32 %v676, 2147483648
    %v680 = vmul.f32 %v678, 1.442695
    %v681 = vpow.pop %v680
    %v682 = vmul.f32 %v679, 1.442695
    %v683 = vpow.pop %v682
    %v684 = vadd.f32 %v681, 1.0
    %v685 = vadd.f32 %v683, 1.0
    %v686 = vrcp.pop %v684
    %v687 = vmul.f32 %v684, %v686
    %v688 = vsub.f32 1.0, %v687
    %v689 = vmul.f32 %v686, %v688
    %v690 = vadd.f32 %v686, %v689
    %vm691 = vweird.f32 %v684
    %vm692 = vweird.f32 %v686
    %vm693 = vmor %vm691, %vm692
    %v694 = vsel %vm693, %v686, %v690
    %v695 = vand.u32 2147483647, %v684
    %vm696 = vcmp.eq.f32.partialorder %v695, 8.507059e+37
    %v697 = vand.u32 %v684, 2147483648
    %v698 = vor.u32 1.1754944e-38, %v697
    %v699 = vsel %vm696, %v698, %v694
    %v700 = vmul.f32 1.0, %v699
    %v701 = vrcp.pop %v685
    %v702 = vmul.f32 %v685, %v701
    %v703 = vsub.f32 1.0, %v702
    %v704 = vmul.f32 %v701, %v703
    %v705 = vadd.f32 %v701, %v704
    %vm706 = vweird.f32 %v685
    %vm707 = vweird.f32 %v701
    %vm708 = vmor %vm706, %vm707
    %v709 = vsel %vm708, %v701, %v705
    %v710 = vand.u32 2147483647, %v685
    %vm711 = vcmp.eq.f32.partialorder %v710, 8.507059e+37
    %v712 = vand.u32 %v685, 2147483648
    %v713 = vor.u32 1.1754944e-38, %v712
    %v714 = vsel %vm711, %v713, %v709
    %v715 = vmul.f32 1.0, %v714
    %v716 = vmul.f32 %v673, %v700
    %v717 = vmul.f32 %v676, %v715
    %s718 = scalar_lea.vmem %s12, 32
    %v719 = vld [vmem:[%s718] sm:$0xff]
    %v720 = vld [vmem:[%s718 + $0x8] sm:$0xff]
    %v721 = vld [vmem:[%s718 + $0x10] sm:$0xff]
    %v722 = vld [vmem:[%s718 + $0x18] sm:$0xff]
    %s723 = scalar_lea.vmem [#allocation14], 1
    %v724 = vld [vmem:[%s723] sm:$0x1]
    %v726 = vperm.slane %v724, 0
    %v729 = vsel %vm253, %v716, 0
    %v732 = vsel %vm253, %v717, 0
    %734 = vmatpush.msra.mxu0 0.0
    %735 = vmatpush.msra.mxu0 0.0
    %736 = vmatpush.msra.mxu0 0.0
    %737 = vmatpush.msra.mxu0 0.0
    %738 = vmatpush.msra.mxu0 0.0
    %739 = vmatpush.msra.mxu0 0.0
    %740 = vmatpush.msra.mxu0 0.0
    %741 = vmatpush.msra.mxu0 0.0
    %742 = vmatpush.msra.mxu0 0.0
    %743 = vmatpush.msra.mxu0 0.0
    %744 = vmatpush.msra.mxu0 0.0
    %745 = vmatpush.msra.mxu0 0.0
    %746 = vmatpush.msra.mxu0 %v722
    %747 = vmatpush.msra.mxu0 %v721
    %748 = vmatpush.msra.mxu0 %v720
    %749 = vmatpush.msra.mxu0 %v719
    %750 = vmatmul.f32.gmra.mxu0 %v729
    %v751 = vpop.f32.mrf.mxu0
    %v752 = vadd.f32 %v726, %v751
    %753 = vmatmul.f32.gmra.mxu0 %v732
    %v754 = vpop.f32.mrf.mxu0
    %v755 = vadd.f32 %v726, %v754
    %756 = vdwg.mxu0
    %v757 = vxor.u32 %v752, 2147483648
    %v758 = vxor.u32 %v755, 2147483648
    %v759 = vmul.f32 %v757, 1.442695
    %v760 = vpow.pop %v759
    %v761 = vmul.f32 %v758, 1.442695
    %v762 = vpow.pop %v761
    %v763 = vadd.f32 %v760, 1.0
    %v764 = vadd.f32 %v762, 1.0
    %v765 = vrcp.pop %v763
    %v766 = vmul.f32 %v763, %v765
    %v767 = vsub.f32 1.0, %v766
    %v768 = vmul.f32 %v765, %v767
    %v769 = vadd.f32 %v765, %v768
    %vm770 = vweird.f32 %v763
    %vm771 = vweird.f32 %v765
    %vm772 = vmor %vm770, %vm771
    %v773 = vsel %vm772, %v765, %v769
    %v774 = vand.u32 2147483647, %v763
    %vm775 = vcmp.eq.f32.partialorder %v774, 8.507059e+37
    %v776 = vand.u32 %v763, 2147483648
    %v777 = vor.u32 1.1754944e-38, %v776
    %v778 = vsel %vm775, %v777, %v773
    %v779 = vmul.f32 1.0, %v778
    %v780 = vrcp.pop %v764
    %v781 = vmul.f32 %v764, %v780
    %v782 = vsub.f32 1.0, %v781
    %v783 = vmul.f32 %v780, %v782
    %v784 = vadd.f32 %v780, %v783
    %vm785 = vweird.f32 %v764
    %vm786 = vweird.f32 %v780
    %vm787 = vmor %vm785, %vm786
    %v788 = vsel %vm787, %v780, %v784
    %v789 = vand.u32 2147483647, %v764
    %vm790 = vcmp.eq.f32.partialorder %v789, 8.507059e+37
    %v791 = vand.u32 %v764, 2147483648
    %v792 = vor.u32 1.1754944e-38, %v791
    %v793 = vsel %vm790, %v792, %v788
    %v794 = vmul.f32 1.0, %v793
    %v795 = vmul.f32 %v752, %v779
    %v796 = vmul.f32 %v755, %v794
    %v797 = vadd.f32 %v637, %v795
    %v798 = vadd.f32 %v638, %v796
    %799 = vst.msk [vmem:[#allocation16] sm:$0xff] %vm253, %v797
    %800 = vst.msk [vmem:[#allocation16 + $0x8] sm:$0xff] %vm253, %v798
    // Predicated region
    $region90: #{interaction_pp_block.5} parent=1 // pred_check
      _
    $region91: #{interaction_pp_block.5} parent=1 // pred_check_branch
      %802 = sbr.rel (0) target = $region93
    $region92: #{interaction_pp_block.5} parent=1 // pred_region
      %804 = vsyncadd [#allocation4], 0
      %s805 = sshll.u32 [#allocation16], 4
      %s806 = int_to_ptr.vmem [resolvable:$true] %s805
      %s807 = sshll.u32 %s14, 4
      %s808 = int_to_ptr.hbm [resolvable:$true] %s807
      %813 = dma.vmem_to_hbm [thread:$0]  %s806, 256, %s808, [#allocation4], 128, 128, 8
    $region93: #{interaction_pp_block.5} parent=1 // pred_fallthru
      _
    // Predicated region
    $region94: #{interaction_pp_block.5} parent=1 // pred_check
      _
    $region95: #{interaction_pp_block.5} parent=1 // pred_check_branch
      %815 = sbr.rel (0) target = $region97
    $region96: #{interaction_pp_block.5} parent=1 // pred_region
      %817 = dma.done [#allocation4], 256
    $region97: #{interaction_pp_block.5} parent=1 // pred_fallthru
      _
    %818 = vsyncpa [#allocation3], 1
    %819 = vsyncpa [#allocation6], 1
    %820 = vsyncpa [#allocation9], 1
    %821 = vsyncpa [#allocation12], 1
    %822 = vsyncpa [#allocation15], 1
    %823 = vsyncpa [#allocation4], 1

</llo_original>
